<compile_context>
chip_gen: v7x
topology: tpu7x:2x2x1
jax: 0.10.0
libtpu: 0.0.40
codegen_flags: <defaults>
</compile_context>

<pallas_src>
import math

import jax
import jax.numpy as jnp
from jax.experimental import pallas as pl
from jax.experimental.pallas import tpu as pltpu

S = 10  # fixed by key1_linear / key2_linear = nn.Linear(10, 10)


def _round_up(x, m):
    return (x + m - 1) // m * m


def _cdiv(a, b):
    return -(-a // b)


# --------------------------------------------------------------------------
# One-time weight preprocessing (hoisted out of the per-call hot path).
# --------------------------------------------------------------------------
def prepare_params(params):
    """Returns (slab, layout, key_parts).

    slab      : [R, C] f32 — all shared-linear weights/biases packed into one
                128-lane-padded array, each piece starting at an 8-aligned row.
    layout    : dict name -> (row_off, nrows, ncols) static slab offsets.
    key_parts : (wk1_s, bk1_s, wk2_s, bk2_s) with the 1/sqrt(2H) scale folded
                in; used by the wrapper to build the block-diagonal key
                operands (which depend on the per-step batch size).
    """
    wq, bq, wk1, bk1, wk2, bk2, wv1, bv1, wv2, bv2, wf, bf = params
    dim = wq.shape[0]                 # 2H
    h = dim // 2
    scale = 1.0 / math.sqrt(dim)      # d_k = query.shape[-1] = 2H
    f32 = jnp.float32

    pieces = {
        "wqa_t": jnp.asarray(wq[:, :h].T, f32),        # [H, 2H]  (query, audio half)
        "wqv_t": jnp.asarray(wq[:, h:].T, f32),        # [H, 2H]  (query, video half)
        "bq":    jnp.asarray(bq, f32).reshape(1, dim),
        "wv1_t": jnp.asarray(wv1.T, f32),              # [H, H]
        "bv1":   jnp.asarray(bv1, f32).reshape(1, h),
        "wv2_t": jnp.asarray(wv2.T, f32),
        "bv2":   jnp.asarray(bv2, f32).reshape(1, h),
        "wf_t":  jnp.asarray(wf.T, f32),               # [2H, H]
        "bf":    jnp.asarray(bf, f32).reshape(1, h),
    }

    cols = _round_up(max(p.shape[1] for p in pieces.values()), 128)
    layout = {}
    blocks = []
    row = 0
    for name, p in pieces.items():
        nr, nc = p.shape
        layout[name] = (row, nr, nc)
        nr_pad = _round_up(nr, 8)
        blocks.append(jnp.pad(p, ((0, nr_pad - nr), (0, cols - nc))))
        row += nr_pad
    slab = jnp.concatenate(blocks, axis=0)             # [R, cols]

    key_parts = (
        jnp.asarray(wk1.T * scale, f32),                # wk1_s [S, S]
        jnp.asarray(bk1 * scale, f32).reshape(1, S),    # bk1_s [1, S]
        jnp.asarray(wk2.T * scale, f32),
        jnp.asarray(bk2 * scale, f32).reshape(1, S),
    )
    return slab, layout, key_parts


# --------------------------------------------------------------------------
# Kernel
# --------------------------------------------------------------------------
def _make_kernel(tb, h, layout):
    dim = 2 * h
    n = tb * S

    def kernel(audio_ref, video_ref, slab_ref, bd_ref, kbias_ref, out_ref,
               qbuf, v1buf, v2buf, keysbuf, wbuf):
        f32 = jnp.float32

        def w(name):
            r0, nr, nc = layout[name]            # static Python ints, 8-aligned rows
            return slab_ref[pl.ds(r0, nr), pl.ds(0, nc)]

        a = audio_ref[0]                         # [N, H]
        v = video_ref[0]                         # [N, H]

        # Shared-weight linears — one flattened matmul each over the whole block.
        qbuf[...] = (jnp.dot(a, w("wqa_t"), preferred_element_type=f32)
                     + jnp.dot(v, w("wqv_t"), preferred_element_type=f32)
                     + w("bq"))                                        # [N, 2H]
        v1buf[...] = jnp.dot(a, w("wv1_t"), preferred_element_type=f32) + w("bv1")
        v2buf[...] = jnp.dot(v, w("wv2_t"), preferred_element_type=f32) + w("bv2")

        # Keys for ALL batch elements at once via block-diagonal key weights,
        # both branches row-stacked into one (2H, N) scratch.  Key biases are
        # added once here (no broadcasts inside the loop below).
        keysbuf[pl.ds(0, h), :] = (
            jnp.dot(a.T, bd_ref[0], preferred_element_type=f32) + kbias_ref[0])
        keysbuf[pl.ds(h, h), :] = (
            jnp.dot(v.T, bd_ref[1], preferred_element_type=f32) + kbias_ref[1])

        # Per-batch-element attention bmms (static unroll; tb kept small).
        for b in range(tb):
            r0 = b * S
            q_b = qbuf[pl.ds(r0, S), :]                 # [S, 2H]
            k12 = keysbuf[:, pl.ds(r0, S)]              # [2H, S]  (both branches)
            # scores for both branches in one matmul / one tanh on a [2H, 2H] tile
            s12 = jnp.tanh(jnp.dot(k12, q_b, preferred_element_type=f32))
            s1 = s12[0:h, :]                            # [H, 2H]
            s2 = s12[h:dim, :]
            w1 = jnp.maximum(jnp.tanh(jnp.dot(v1buf[pl.ds(r0, S), :], s1,
                                              preferred_element_type=f32)), 0.0)
            w2 = jnp.maximum(jnp.tanh(jnp.dot(v2buf[pl.ds(r0, S), :], s2,
                                              preferred_element_type=f32)), 0.0)
            wbuf[0, pl.ds(r0, S), :] = w1
            wbuf[1, pl.ds(r0, S), :] = w2

        # fc_fusion per branch: two aligned [N,2H]@[2H,H] matmuls (N = 10*tb is
        # rarely a multiple of 8, so a stacked [2N,2H] matmul would just add
        # misaligned stores for no MXU saving).
        wf_t = w("wf_t")
        bf = w("bf")
        fc1 = jnp.maximum(jnp.dot(wbuf[0], wf_t, preferred_element_type=f32) + bf, 0.0)
        fc2 = jnp.maximum(jnp.dot(wbuf[1], wf_t, preferred_element_type=f32) + bf, 0.0)

        # (audio + fc_fusion(out1)) + (video + fc_fusion(out2))
        out_ref[0] = (audio_ref[0] + video_ref[0] + fc1 + fc2).astype(out_ref.dtype)

    return kernel


# --------------------------------------------------------------------------
# Grid choice (generation-aware per review: one fat step on single-TC parts,
# even fat steps when the batch is large enough to split).
# --------------------------------------------------------------------------
def _choose_grid(batch, max_tb):
    if batch <= max_tb:
        return 1, batch                  # single fat step (best on v5e/v6e; fine on v7x)
    g = _cdiv(batch, max_tb)
    if g % 2 == 1:                       # keep an even number of fat steps for v7x
        g += 1
    tb = _cdiv(batch, g)
    return g, tb


def joint_coattn(audio, video, prepped, *, max_tb=8):
    """audio, video: [B, S, H] float32. Returns [B, S, H]."""
    slab, layout, (wk1_s, bk1_s, wk2_s, bk2_s) = prepped
    b, s_, h = audio.shape
    assert s_ == S, f"sequence length must be {S} (fixed by key linears)"
    dim = 2 * h

    g, tb = _choose_grid(b, max_tb)
    bp = g * tb
    if bp != b:                          # pad awkward batch sizes instead of tb=1 cliff
        pad = ((0, bp - b), (0, 0), (0, 0))
        audio = jnp.pad(audio, pad)
        video = jnp.pad(video, pad)
    n = tb * s_

    # Free (contiguous) reshapes: [BP, S, H] -> [G, TB*S, H].
    a_in = audio.reshape(g, n, h)
    v_in = video.reshape(g, n, h)

    # Block-diagonal key operands (depend on tb, so built here; tiny kron).
    eye = jnp.eye(tb, dtype=jnp.float32)
    bd = jnp.stack([jnp.kron(eye, wk1_s), jnp.kron(eye, wk2_s)])          # (2, N, N)
    kbias = jnp.stack([jnp.tile(bk1_s, (1, tb)), jnp.tile(bk2_s, (1, tb))])  # (2, 1, N)

    data_spec = pl.BlockSpec((1, n, h), lambda i: (i, 0, 0))

    def const_spec(x):
        nd = x.ndim
        return pl.BlockSpec(x.shape, lambda i: (0,) * nd)

    out = pl.pallas_call(
        _make_kernel(tb, h, layout),
        out_shape=jax.ShapeDtypeStruct((g, n, h), audio.dtype),
        grid=(g,),
        in_specs=[data_spec, data_spec,
                  const_spec(slab), const_spec(bd), const_spec(kbias)],
        out_specs=data_spec,
        scratch_shapes=[
            pltpu.VMEM((n, dim), jnp.float32),     # query
            pltpu.VMEM((n, h), jnp.float32),       # value1
            pltpu.VMEM((n, h), jnp.float32),       # value2
            pltpu.VMEM((dim, n), jnp.float32),     # keys (branch1 rows 0:H, branch2 H:2H)
            pltpu.VMEM((2, n, dim), jnp.float32),  # weighted, branch-major
        ],
        compiler_params=pltpu.CompilerParams(
            dimension_semantics=(("parallel",) if g > 1 else ("arbitrary",))),
    )(a_in, v_in, slab, bd, kbias)

    return out.reshape(bp, s_, h)[:b]


# --------------------------------------------------------------------------
# Pure-JAX reference (mirrors the PyTorch forward in eval mode).
# --------------------------------------------------------------------------
def reference(audio, video, params):
    wq, bq, wk1, bk1, wk2, bk2, wv1, bv1, wv2, bv2, wf, bf = params

    def lin(x, w, b):
        return x @ w.T + b

    joint = jnp.concatenate([audio, video], axis=-1)
    query = lin(joint, wq, bq)
    key1 = lin(jnp.swapaxes(audio, 1, 2), wk1, bk1)
    key2 = lin(jnp.swapaxes(video, 1, 2), wk2, bk2)
    value1 = lin(audio, wv1, bv1)
    value2 = lin(video, wv2, bv2)
    d_k = query.shape[-1]

    def qkv(key, value):
        scores = jnp.tanh(jnp.einsum('bij,bjk->bik', key, query) / math.sqrt(d_k))
        weighted = jnp.tanh(jnp.einsum('bij,bjk->bik', value, scores))
        return jax.nn.relu(weighted)

    out1, out2 = qkv(key1, value1), qkv(key2, value2)

    def fuse(o):
        return jax.nn.relu(lin(o, wf, bf))

    return (audio + fuse(out1)) + (video + fuse(out2))


if __name__ == "__main__":
    H = 32                 # hid_dim = 32, dim = 2*hid_dim = 64
    dim = 2 * H

    key = jax.random.PRNGKey(0)
    ks = jax.random.split(key, 16)

    def init(k, shape, fan_in):
        bound = 1.0 / math.sqrt(fan_in)
        return jax.random.uniform(k, shape, jnp.float32, -bound, bound)

    # Parameter shapes mirror nn.Linear(out, in) from __init__.
    params = (
        init(ks[0], (dim, dim), dim),  init(ks[1], (dim,), dim),   # query_linear
        init(ks[2], (S, S), S),        init(ks[3], (S,), S),       # key1_linear
        init(ks[4], (S, S), S),        init(ks[5], (S,), S),       # key2_linear
        init(ks[6], (H, H), H),        init(ks[7], (H,), H),       # value1_linear
        init(ks[8], (H, H), H),        init(ks[9], (H,), H),       # value2_linear
        init(ks[10], (H, dim), dim),   init(ks[11], (H,), dim),    # fc_fusion[0]
    )

    prepped = prepare_params(params)   # one-time weight prep (hoisted)
    fwd = jax.jit(lambda a, v: joint_coattn(a, v, prepped))

    # Primary small case: B=2 -> single fat grid step (g=1, tb=2).
    B = 2
    audio = jax.random.normal(ks[12], (B, S, H), jnp.float32)
    video = jax.random.normal(ks[13], (B, S, H), jnp.float32)
    out = jax.block_until_ready(fwd(audio, video))
    ref = reference(audio, video, params)
    assert out.shape == (B, S, H)
    assert jnp.allclose(out, ref, rtol=1e-5, atol=1e-4), "mismatch vs JAX reference (B=2)"

    # Awkward batch: exercises batch padding + even multi-step grid (g=2, tb=7).
    B2 = 13
    audio2 = jax.random.normal(ks[14], (B2, S, H), jnp.float32)
    video2 = jax.random.normal(ks[15], (B2, S, H), jnp.float32)
    out2 = jax.block_until_ready(fwd(audio2, video2))
    ref2 = reference(audio2, video2, params)
    assert out2.shape == (B2, S, H)
    assert jnp.allclose(out2, ref2, rtol=1e-5, atol=1e-4), "mismatch vs JAX reference (B=13)"

    print("KERNEL_OK")
</pallas_src>

<mosaic_0001>
module attributes {stable_mosaic.version = 11 : i64} {
  func.func @kernel(%arg0: i32, %arg1: memref<1x20x32xf32, #tpu.memory_space<vmem>>, %arg2: memref<1x20x32xf32, #tpu.memory_space<vmem>>, %arg3: memref<224x128xf32, #tpu.memory_space<vmem>>, %arg4: memref<2x20x20xf32, #tpu.memory_space<vmem>>, %arg5: memref<2x1x20xf32, #tpu.memory_space<vmem>>, %arg6: memref<1x20x32xf32, #tpu.memory_space<vmem>>, %arg7: memref<20x64xf32, #tpu.memory_space<vmem>>, %arg8: memref<20x32xf32, #tpu.memory_space<vmem>>, %arg9: memref<20x32xf32, #tpu.memory_space<vmem>>, %arg10: memref<64x20xf32, #tpu.memory_space<vmem>>, %arg11: memref<2x20x64xf32, #tpu.memory_space<vmem>>) attributes {dimension_semantics = [#tpu.dimension_semantics<arbitrary>], iteration_bounds = array<i64: 1>, scalar_prefetch = 0 : i64, scratch_operands = 5 : i64, tpu.core_type = #tpu.core_type<tc>, window_params = [{transform_indices = @transform_0, window_bounds = array<i64: 1, 20, 32>}, {transform_indices = @transform_1, window_bounds = array<i64: 1, 20, 32>}, {pipeline_mode = #tpu.pipeline_mode<synchronous>, transform_indices = @transform_2, window_bounds = array<i64: 224, 128>}, {pipeline_mode = #tpu.pipeline_mode<synchronous>, transform_indices = @transform_3, window_bounds = array<i64: 2, 20, 20>}, {pipeline_mode = #tpu.pipeline_mode<synchronous>, transform_indices = @transform_4, window_bounds = array<i64: 2, 1, 20>}, {transform_indices = @transform_5, window_bounds = array<i64: 1, 20, 32>}]} {
    %c0 = arith.constant 0 : index
    %c0_0 = arith.constant 0 : index
    %c0_1 = arith.constant 0 : index
    %0 = vector.load %arg1[%c0, %c0_0, %c0_1] : memref<1x20x32xf32, #tpu.memory_space<vmem>>, vector<1x20x32xf32>
    %1 = vector.shape_cast %0 : vector<1x20x32xf32> to vector<20x32xf32>
    %c0_2 = arith.constant 0 : index
    %c0_3 = arith.constant 0 : index
    %c0_4 = arith.constant 0 : index
    %2 = vector.load %arg2[%c0_2, %c0_3, %c0_4] : memref<1x20x32xf32, #tpu.memory_space<vmem>>, vector<1x20x32xf32>
    %3 = vector.shape_cast %2 : vector<1x20x32xf32> to vector<20x32xf32>
    %c0_5 = arith.constant 0 : index
    %c0_6 = arith.constant 0 : index
    %4 = vector.load %arg3[%c0_5, %c0_6] : memref<224x128xf32, #tpu.memory_space<vmem>>, vector<32x64xf32>
    %cst = arith.constant dense<0.000000e+00> : vector<20x64xf32>
    %5 = tpu.matmul %1, %4, %cst {dimension_numbers = #tpu.dot_dimension_numbers<[1], [0], [0], [1], [0, 0, 1, 1], [], []>} : vector<20x32xf32>, vector<32x64xf32>, vector<20x64xf32> -> vector<20x64xf32>
    %c32 = arith.constant 32 : index
    %c0_7 = arith.constant 0 : index
    %6 = vector.load %arg3[%c32, %c0_7] : memref<224x128xf32, #tpu.memory_space<vmem>>, vector<32x64xf32>
    %cst_8 = arith.constant dense<0.000000e+00> : vector<20x64xf32>
    %7 = tpu.matmul %3, %6, %cst_8 {dimension_numbers = #tpu.dot_dimension_numbers<[1], [0], [0], [1], [0, 0, 1, 1], [], []>} : vector<20x32xf32>, vector<32x64xf32>, vector<20x64xf32> -> vector<20x64xf32>
    %8 = arith.addf %5, %7 : vector<20x64xf32>
    %c64 = arith.constant 64 : index
    %c0_9 = arith.constant 0 : index
    %9 = vector.load %arg3[%c64, %c0_9] : memref<224x128xf32, #tpu.memory_space<vmem>>, vector<1x64xf32>
    %10 = vector.broadcast %9 : vector<1x64xf32> to vector<20x64xf32>
    %11 = arith.addf %8, %10 : vector<20x64xf32>
    %c0_10 = arith.constant 0 : index
    %c0_11 = arith.constant 0 : index
    %12 = vector.load %arg7[%c0_10, %c0_11] : memref<20x64xf32, #tpu.memory_space<vmem>>, vector<20x64xf32>
    tpu.vector_store %arg7[%c0_10, %c0_11], %11 {strides = array<i32>} : memref<20x64xf32, #tpu.memory_space<vmem>>, vector<20x64xf32>,
    %c72 = arith.constant 72 : index
    %c0_12 = arith.constant 0 : index
    %13 = vector.load %arg3[%c72, %c0_12] : memref<224x128xf32, #tpu.memory_space<vmem>>, vector<32x32xf32>
    %cst_13 = arith.constant dense<0.000000e+00> : vector<20x32xf32>
    %14 = tpu.matmul %1, %13, %cst_13 {dimension_numbers = #tpu.dot_dimension_numbers<[1], [0], [0], [1], [0, 0, 1, 1], [], []>} : vector<20x32xf32>, vector<32x32xf32>, vector<20x32xf32> -> vector<20x32xf32>
    %c104 = arith.constant 104 : index
    %c0_14 = arith.constant 0 : index
    %15 = vector.load %arg3[%c104, %c0_14] : memref<224x128xf32, #tpu.memory_space<vmem>>, vector<1x32xf32>
    %16 = vector.broadcast %15 : vector<1x32xf32> to vector<20x32xf32>
    %17 = arith.addf %14, %16 : vector<20x32xf32>
    %c0_15 = arith.constant 0 : index
    %c0_16 = arith.constant 0 : index
    %18 = vector.load %arg8[%c0_15, %c0_16] : memref<20x32xf32, #tpu.memory_space<vmem>>, vector<20x32xf32>
    tpu.vector_store %arg8[%c0_15, %c0_16], %17 {strides = array<i32>} : memref<20x32xf32, #tpu.memory_space<vmem>>, vector<20x32xf32>,
    %c112 = arith.constant 112 : index
    %c0_17 = arith.constant 0 : index
    %19 = vector.load %arg3[%c112, %c0_17] : memref<224x128xf32, #tpu.memory_space<vmem>>, vector<32x32xf32>
    %cst_18 = arith.constant dense<0.000000e+00> : vector<20x32xf32>
    %20 = tpu.matmul %3, %19, %cst_18 {dimension_numbers = #tpu.dot_dimension_numbers<[1], [0], [0], [1], [0, 0, 1, 1], [], []>} : vector<20x32xf32>, vector<32x32xf32>, vector<20x32xf32> -> vector<20x32xf32>
    %c144 = arith.constant 144 : index
    %c0_19 = arith.constant 0 : index
    %21 = vector.load %arg3[%c144, %c0_19] : memref<224x128xf32, #tpu.memory_space<vmem>>, vector<1x32xf32>
    %22 = vector.broadcast %21 : vector<1x32xf32> to vector<20x32xf32>
    %23 = arith.addf %20, %22 : vector<20x32xf32>
    %c0_20 = arith.constant 0 : index
    %c0_21 = arith.constant 0 : index
    %24 = vector.load %arg9[%c0_20, %c0_21] : memref<20x32xf32, #tpu.memory_space<vmem>>, vector<20x32xf32>
    tpu.vector_store %arg9[%c0_20, %c0_21], %23 {strides = array<i32>} : memref<20x32xf32, #tpu.memory_space<vmem>>, vector<20x32xf32>,
    %25 = tpu.transpose %1, [1, 0] : vector<20x32xf32> -> vector<32x20xf32>
    %c0_22 = arith.constant 0 : index
    %c0_23 = arith.constant 0 : index
    %c0_24 = arith.constant 0 : index
    %26 = vector.load %arg4[%c0_22, %c0_23, %c0_24] : memref<2x20x20xf32, #tpu.memory_space<vmem>>, vector<1x20x20xf32>
    %27 = vector.shape_cast %26 : vector<1x20x20xf32> to vector<20x20xf32>
    %cst_25 = arith.constant dense<0.000000e+00> : vector<32x20xf32>
    %28 = tpu.matmul %25, %27, %cst_25 {dimension_numbers = #tpu.dot_dimension_numbers<[1], [0], [0], [1], [0, 0, 1, 1], [], []>} : vector<32x20xf32>, vector<20x20xf32>, vector<32x20xf32> -> vector<32x20xf32>
    %c0_26 = arith.constant 0 : index
    %c0_27 = arith.constant 0 : index
    %c0_28 = arith.constant 0 : index
    %29 = vector.load %arg5[%c0_26, %c0_27, %c0_28] : memref<2x1x20xf32, #tpu.memory_space<vmem>>, vector<1x1x20xf32>
    %30 = vector.shape_cast %29 : vector<1x1x20xf32> to vector<1x20xf32>
    %31 = vector.broadcast %30 : vector<1x20xf32> to vector<32x20xf32>
    %32 = arith.addf %28, %31 : vector<32x20xf32>
    %c0_29 = arith.constant 0 : index
    %c0_30 = arith.constant 0 : index
    %33 = vector.load %arg10[%c0_29, %c0_30] : memref<64x20xf32, #tpu.memory_space<vmem>>, vector<32x20xf32>
    tpu.vector_store %arg10[%c0_29, %c0_30], %32 {strides = array<i32>} : memref<64x20xf32, #tpu.memory_space<vmem>>, vector<32x20xf32>,
    %34 = tpu.transpose %3, [1, 0] : vector<20x32xf32> -> vector<32x20xf32>
    %c1 = arith.constant 1 : index
    %c0_31 = arith.constant 0 : index
    %c0_32 = arith.constant 0 : index
    %35 = vector.load %arg4[%c1, %c0_31, %c0_32] : memref<2x20x20xf32, #tpu.memory_space<vmem>>, vector<1x20x20xf32>
    %36 = vector.shape_cast %35 : vector<1x20x20xf32> to vector<20x20xf32>
    %cst_33 = arith.constant dense<0.000000e+00> : vector<32x20xf32>
    %37 = tpu.matmul %34, %36, %cst_33 {dimension_numbers = #tpu.dot_dimension_numbers<[1], [0], [0], [1], [0, 0, 1, 1], [], []>} : vector<32x20xf32>, vector<20x20xf32>, vector<32x20xf32> -> vector<32x20xf32>
    %c1_34 = arith.constant 1 : index
    %c0_35 = arith.constant 0 : index
    %c0_36 = arith.constant 0 : index
    %38 = vector.load %arg5[%c1_34, %c0_35, %c0_36] : memref<2x1x20xf32, #tpu.memory_space<vmem>>, vector<1x1x20xf32>
    %39 = vector.shape_cast %38 : vector<1x1x20xf32> to vector<1x20xf32>
    %40 = vector.broadcast %39 : vector<1x20xf32> to vector<32x20xf32>
    %41 = arith.addf %37, %40 : vector<32x20xf32>
    %c32_37 = arith.constant 32 : index
    %c0_38 = arith.constant 0 : index
    %42 = vector.load %arg10[%c32_37, %c0_38] : memref<64x20xf32, #tpu.memory_space<vmem>>, vector<32x20xf32>
    tpu.vector_store %arg10[%c32_37, %c0_38], %41 {strides = array<i32>} : memref<64x20xf32, #tpu.memory_space<vmem>>, vector<32x20xf32>,
    %c0_39 = arith.constant 0 : index
    %c0_40 = arith.constant 0 : index
    %43 = vector.load %arg7[%c0_39, %c0_40] : memref<20x64xf32, #tpu.memory_space<vmem>>, vector<10x64xf32>
    %c0_41 = arith.constant 0 : index
    %c0_42 = arith.constant 0 : index
    %44 = vector.load %arg10[%c0_41, %c0_42] : memref<64x20xf32, #tpu.memory_space<vmem>>, vector<64x10xf32>
    %cst_43 = arith.constant dense<0.000000e+00> : vector<64x64xf32>
    %45 = tpu.matmul %44, %43, %cst_43 {dimension_numbers = #tpu.dot_dimension_numbers<[1], [0], [0], [1], [0, 0, 1, 1], [], []>} : vector<64x10xf32>, vector<10x64xf32>, vector<64x64xf32> -> vector<64x64xf32>
    %46 = math.tanh %45 : vector<64x64xf32>
    %47 = vector.extract_strided_slice %46 {offsets = [0, 0], sizes = [32, 64], strides = [1, 1]} : vector<64x64xf32> to vector<32x64xf32>
    %48 = vector.extract_strided_slice %46 {offsets = [32, 0], sizes = [32, 64], strides = [1, 1]} : vector<64x64xf32> to vector<32x64xf32>
    %c0_44 = arith.constant 0 : index
    %c0_45 = arith.constant 0 : index
    %49 = vector.load %arg8[%c0_44, %c0_45] : memref<20x32xf32, #tpu.memory_space<vmem>>, vector<10x32xf32>
    %cst_46 = arith.constant dense<0.000000e+00> : vector<10x64xf32>
    %50 = tpu.matmul %49, %47, %cst_46 {dimension_numbers = #tpu.dot_dimension_numbers<[1], [0], [0], [1], [0, 0, 1, 1], [], []>} : vector<10x32xf32>, vector<32x64xf32>, vector<10x64xf32> -> vector<10x64xf32>
    %51 = math.tanh %50 : vector<10x64xf32>
    %cst_47 = arith.constant 0.000000e+00 : f32
    %52 = vector.broadcast %cst_47 : f32 to vector<10x64xf32>
    %53 = arith.maximumf %51, %52 : vector<10x64xf32>
    %c0_48 = arith.constant 0 : index
    %c0_49 = arith.constant 0 : index
    %54 = vector.load %arg9[%c0_48, %c0_49] : memref<20x32xf32, #tpu.memory_space<vmem>>, vector<10x32xf32>
    %cst_50 = arith.constant dense<0.000000e+00> : vector<10x64xf32>
    %55 = tpu.matmul %54, %48, %cst_50 {dimension_numbers = #tpu.dot_dimension_numbers<[1], [0], [0], [1], [0, 0, 1, 1], [], []>} : vector<10x32xf32>, vector<32x64xf32>, vector<10x64xf32> -> vector<10x64xf32>
    %56 = math.tanh %55 : vector<10x64xf32>
    %cst_51 = arith.constant 0.000000e+00 : f32
    %57 = vector.broadcast %cst_51 : f32 to vector<10x64xf32>
    %58 = arith.maximumf %56, %57 : vector<10x64xf32>
    %c0_52 = arith.constant 0 : index
    %c0_53 = arith.constant 0 : index
    %c0_54 = arith.constant 0 : index
    %59 = vector.load %arg11[%c0_52, %c0_53, %c0_54] : memref<2x20x64xf32, #tpu.memory_space<vmem>>, vector<1x10x64xf32>
    %60 = vector.shape_cast %59 : vector<1x10x64xf32> to vector<10x64xf32>
    %61 = vector.shape_cast %53 : vector<10x64xf32> to vector<1x10x64xf32>
    tpu.vector_store %arg11[%c0_52, %c0_53, %c0_54], %61 {strides = array<i32>} : memref<2x20x64xf32, #tpu.memory_space<vmem>>, vector<1x10x64xf32>,
    %c1_55 = arith.constant 1 : index
    %c0_56 = arith.constant 0 : index
    %c0_57 = arith.constant 0 : index
    %62 = vector.load %arg11[%c1_55, %c0_56, %c0_57] : memref<2x20x64xf32, #tpu.memory_space<vmem>>, vector<1x10x64xf32>
    %63 = vector.shape_cast %62 : vector<1x10x64xf32> to vector<10x64xf32>
    %64 = vector.shape_cast %58 : vector<10x64xf32> to vector<1x10x64xf32>
    tpu.vector_store %arg11[%c1_55, %c0_56, %c0_57], %64 {strides = array<i32>} : memref<2x20x64xf32, #tpu.memory_space<vmem>>, vector<1x10x64xf32>,
    %c10 = arith.constant 10 : index
    %c0_58 = arith.constant 0 : index
    %65 = vector.load %arg7[%c10, %c0_58] : memref<20x64xf32, #tpu.memory_space<vmem>>, vector<10x64xf32>
    %c0_59 = arith.constant 0 : index
    %c10_60 = arith.constant 10 : index
    %66 = vector.load %arg10[%c0_59, %c10_60] : memref<64x20xf32, #tpu.memory_space<vmem>>, vector<64x10xf32>
    %cst_61 = arith.constant dense<0.000000e+00> : vector<64x64xf32>
    %67 = tpu.matmul %66, %65, %cst_61 {dimension_numbers = #tpu.dot_dimension_numbers<[1], [0], [0], [1], [0, 0, 1, 1], [], []>} : vector<64x10xf32>, vector<10x64xf32>, vector<64x64xf32> -> vector<64x64xf32>
    %68 = math.tanh %67 : vector<64x64xf32>
    %69 = vector.extract_strided_slice %68 {offsets = [0, 0], sizes = [32, 64], strides = [1, 1]} : vector<64x64xf32> to vector<32x64xf32>
    %70 = vector.extract_strided_slice %68 {offsets = [32, 0], sizes = [32, 64], strides = [1, 1]} : vector<64x64xf32> to vector<32x64xf32>
    %c10_62 = arith.constant 10 : index
    %c0_63 = arith.constant 0 : index
    %71 = vector.load %arg8[%c10_62, %c0_63] : memref<20x32xf32, #tpu.memory_space<vmem>>, vector<10x32xf32>
    %cst_64 = arith.constant dense<0.000000e+00> : vector<10x64xf32>
    %72 = tpu.matmul %71, %69, %cst_64 {dimension_numbers = #tpu.dot_dimension_numbers<[1], [0], [0], [1], [0, 0, 1, 1], [], []>} : vector<10x32xf32>, vector<32x64xf32>, vector<10x64xf32> -> vector<10x64xf32>
    %73 = math.tanh %72 : vector<10x64xf32>
    %cst_65 = arith.constant 0.000000e+00 : f32
    %74 = vector.broadcast %cst_65 : f32 to vector<10x64xf32>
    %75 = arith.maximumf %73, %74 : vector<10x64xf32>
    %c10_66 = arith.constant 10 : index
    %c0_67 = arith.constant 0 : index
    %76 = vector.load %arg9[%c10_66, %c0_67] : memref<20x32xf32, #tpu.memory_space<vmem>>, vector<10x32xf32>
    %cst_68 = arith.constant dense<0.000000e+00> : vector<10x64xf32>
    %77 = tpu.matmul %76, %70, %cst_68 {dimension_numbers = #tpu.dot_dimension_numbers<[1], [0], [0], [1], [0, 0, 1, 1], [], []>} : vector<10x32xf32>, vector<32x64xf32>, vector<10x64xf32> -> vector<10x64xf32>
    %78 = math.tanh %77 : vector<10x64xf32>
    %cst_69 = arith.constant 0.000000e+00 : f32
    %79 = vector.broadcast %cst_69 : f32 to vector<10x64xf32>
    %80 = arith.maximumf %78, %79 : vector<10x64xf32>
    %c0_70 = arith.constant 0 : index
    %c10_71 = arith.constant 10 : index
    %c0_72 = arith.constant 0 : index
    %81 = vector.load %arg11[%c0_70, %c10_71, %c0_72] : memref<2x20x64xf32, #tpu.memory_space<vmem>>, vector<1x10x64xf32>
    %82 = vector.shape_cast %81 : vector<1x10x64xf32> to vector<10x64xf32>
    %83 = vector.shape_cast %75 : vector<10x64xf32> to vector<1x10x64xf32>
    tpu.vector_store %arg11[%c0_70, %c10_71, %c0_72], %83 {strides = array<i32>} : memref<2x20x64xf32, #tpu.memory_space<vmem>>, vector<1x10x64xf32>,
    %c1_73 = arith.constant 1 : index
    %c10_74 = arith.constant 10 : index
    %c0_75 = arith.constant 0 : index
    %84 = vector.load %arg11[%c1_73, %c10_74, %c0_75] : memref<2x20x64xf32, #tpu.memory_space<vmem>>, vector<1x10x64xf32>
    %85 = vector.shape_cast %84 : vector<1x10x64xf32> to vector<10x64xf32>
    %86 = vector.shape_cast %80 : vector<10x64xf32> to vector<1x10x64xf32>
    tpu.vector_store %arg11[%c1_73, %c10_74, %c0_75], %86 {strides = array<i32>} : memref<2x20x64xf32, #tpu.memory_space<vmem>>, vector<1x10x64xf32>,
    %c152 = arith.constant 152 : index
    %c0_76 = arith.constant 0 : index
    %87 = vector.load %arg3[%c152, %c0_76] : memref<224x128xf32, #tpu.memory_space<vmem>>, vector<64x32xf32>
    %c216 = arith.constant 216 : index
    %c0_77 = arith.constant 0 : index
    %88 = vector.load %arg3[%c216, %c0_77] : memref<224x128xf32, #tpu.memory_space<vmem>>, vector<1x32xf32>
    %c0_78 = arith.constant 0 : index
    %c0_79 = arith.constant 0 : index
    %c0_80 = arith.constant 0 : index
    %89 = vector.load %arg11[%c0_78, %c0_79, %c0_80] : memref<2x20x64xf32, #tpu.memory_space<vmem>>, vector<1x20x64xf32>
    %90 = vector.shape_cast %89 : vector<1x20x64xf32> to vector<20x64xf32>
    %cst_81 = arith.constant dense<0.000000e+00> : vector<20x32xf32>
    %91 = tpu.matmul %90, %87, %cst_81 {dimension_numbers = #tpu.dot_dimension_numbers<[1], [0], [0], [1], [0, 0, 1, 1], [], []>} : vector<20x64xf32>, vector<64x32xf32>, vector<20x32xf32> -> vector<20x32xf32>
    %92 = vector.broadcast %88 : vector<1x32xf32> to vector<20x32xf32>
    %93 = arith.addf %91, %92 : vector<20x32xf32>
    %cst_82 = arith.constant 0.000000e+00 : f32
    %94 = vector.broadcast %cst_82 : f32 to vector<20x32xf32>
    %95 = arith.maximumf %93, %94 : vector<20x32xf32>
    %c1_83 = arith.constant 1 : index
    %c0_84 = arith.constant 0 : index
    %c0_85 = arith.constant 0 : index
    %96 = vector.load %arg11[%c1_83, %c0_84, %c0_85] : memref<2x20x64xf32, #tpu.memory_space<vmem>>, vector<1x20x64xf32>
    %97 = vector.shape_cast %96 : vector<1x20x64xf32> to vector<20x64xf32>
    %cst_86 = arith.constant dense<0.000000e+00> : vector<20x32xf32>
    %98 = tpu.matmul %97, %87, %cst_86 {dimension_numbers = #tpu.dot_dimension_numbers<[1], [0], [0], [1], [0, 0, 1, 1], [], []>} : vector<20x64xf32>, vector<64x32xf32>, vector<20x32xf32> -> vector<20x32xf32>
    %99 = vector.broadcast %88 : vector<1x32xf32> to vector<20x32xf32>
    %100 = arith.addf %98, %99 : vector<20x32xf32>
    %cst_87 = arith.constant 0.000000e+00 : f32
    %101 = vector.broadcast %cst_87 : f32 to vector<20x32xf32>
    %102 = arith.maximumf %100, %101 : vector<20x32xf32>
    %c0_88 = arith.constant 0 : index
    %c0_89 = arith.constant 0 : index
    %c0_90 = arith.constant 0 : index
    %103 = vector.load %arg1[%c0_88, %c0_89, %c0_90] : memref<1x20x32xf32, #tpu.memory_space<vmem>>, vector<1x20x32xf32>
    %104 = vector.shape_cast %103 : vector<1x20x32xf32> to vector<20x32xf32>
    %c0_91 = arith.constant 0 : index
    %c0_92 = arith.constant 0 : index
    %c0_93 = arith.constant 0 : index
    %105 = vector.load %arg2[%c0_91, %c0_92, %c0_93] : memref<1x20x32xf32, #tpu.memory_space<vmem>>, vector<1x20x32xf32>
    %106 = vector.shape_cast %105 : vector<1x20x32xf32> to vector<20x32xf32>
    %107 = arith.addf %104, %106 : vector<20x32xf32>
    %108 = arith.addf %107, %95 : vector<20x32xf32>
    %109 = arith.addf %108, %102 : vector<20x32xf32>
    %c0_94 = arith.constant 0 : index
    %c0_95 = arith.constant 0 : index
    %c0_96 = arith.constant 0 : index
    %110 = vector.load %arg6[%c0_94, %c0_95, %c0_96] : memref<1x20x32xf32, #tpu.memory_space<vmem>>, vector<1x20x32xf32>
    %111 = vector.shape_cast %110 : vector<1x20x32xf32> to vector<20x32xf32>
    %112 = vector.shape_cast %109 : vector<20x32xf32> to vector<1x20x32xf32>
    tpu.vector_store %arg6[%c0_94, %c0_95, %c0_96], %112 {strides = array<i32>} : memref<1x20x32xf32, #tpu.memory_space<vmem>>, vector<1x20x32xf32>,
    return
  }
  func.func @transform_0(%arg0: i32) -> (i32, i32, i32) {
    %c0_i32 = arith.constant 0 : i32
    %c0_i32_0 = arith.constant 0 : i32
    %c0_i32_1 = arith.constant 0 : i32
    return %arg0, %c0_i32, %c0_i32_0 : i32, i32, i32
  }
  func.func @transform_1(%arg0: i32) -> (i32, i32, i32) {
    %c0_i32 = arith.constant 0 : i32
    %c0_i32_0 = arith.constant 0 : i32
    %c0_i32_1 = arith.constant 0 : i32
    return %arg0, %c0_i32, %c0_i32_0 : i32, i32, i32
  }
  func.func @transform_2(%arg0: i32) -> (i32, i32) {
    %c0_i32 = arith.constant 0 : i32
    %c0_i32_0 = arith.constant 0 : i32
    %c0_i32_1 = arith.constant 0 : i32
    return %c0_i32, %c0_i32_0 : i32, i32
  }
  func.func @transform_3(%arg0: i32) -> (i32, i32, i32) {
    %c0_i32 = arith.constant 0 : i32
    %c0_i32_0 = arith.constant 0 : i32
    %c0_i32_1 = arith.constant 0 : i32
    %c0_i32_2 = arith.constant 0 : i32
    return %c0_i32, %c0_i32_0, %c0_i32_1 : i32, i32, i32
  }
  func.func @transform_4(%arg0: i32) -> (i32, i32, i32) {
    %c0_i32 = arith.constant 0 : i32
    %c0_i32_0 = arith.constant 0 : i32
    %c0_i32_1 = arith.constant 0 : i32
    %c0_i32_2 = arith.constant 0 : i32
    return %c0_i32, %c0_i32_0, %c0_i32_1 : i32, i32, i32
  }
  func.func @transform_5(%arg0: i32) -> (i32, i32, i32) {
    %c0_i32 = arith.constant 0 : i32
    %c0_i32_0 = arith.constant 0 : i32
    %c0_i32_1 = arith.constant 0 : i32
    return %arg0, %c0_i32, %c0_i32_0 : i32, i32, i32
  }
}

</mosaic_0001>

<llo_original>
// kernel: _lambda_.1
$region0: #{_lambda_.1}
  #allocation0 [shape = 'u32[]', space=smem, size = 0x4, offset = 0x4, fixed_abs, tag = 'smem constant byte address 0x4 - core index']
  #allocation1 [shape = 'u32[144,128]{1,0:T(1,128)}', space=vmem, size = 0x12000, scoped, tag = 'internal scratch']
  #allocation2 [shape = 'f32[20,64]{1,0:T(8,128)}', space=vmem, size = 0x3000, scoped, tag = 'scratch operand']
  #allocation3 [shape = 'f32[20,32]{1,0:T(8,128)}', space=vmem, size = 0x3000, scoped, tag = 'scratch operand']
  #allocation4 [shape = 'f32[20,32]{1,0:T(8,128)}', space=vmem, size = 0x3000, scoped, tag = 'scratch operand']
  #allocation5 [shape = 'f32[64,20]{1,0:T(8,128)}', space=vmem, size = 0x8000, scoped, tag = 'scratch operand']
  #allocation6 [shape = 'f32[2,20,64]{2,1,0:T(8,128)}', space=vmem, size = 0x6000, scoped, tag = 'scratch operand']
  %s0 = inlined_call_operand.vmem [shape: f32[1,20,32], index: 0, kind: input, shape index: {}]
  %s1 = inlined_call_operand.vmem [shape: f32[1,20,32], index: 1, kind: input, shape index: {}]
  %s2 = inlined_call_operand.vmem [shape: f32[224,128], index: 2, kind: input, shape index: {}]
  %s3 = inlined_call_operand.vmem [shape: f32[2,20,20], index: 3, kind: input, shape index: {}]
  %s4 = inlined_call_operand.vmem [shape: f32[2,1,20], index: 4, kind: input, shape index: {}]
  %s5 = inlined_call_operand.vmem [shape: f32[1,20,32], index: 5, kind: output, shape index: {}]
  %s6 = sld [smem:[#allocation0]]
  $region30: #{_lambda_.1} parent=0
    _
  %s8 = ssub.s32 1, %s6
  %s9 = scalar_select 0, %s8, %s6
  // Predicated region
  $region2: #{_lambda_.1} parent=0 // pred_check
    _
  $region3: #{_lambda_.1} parent=0 // pred_check_branch
    %11 = sbr.rel (0) target = $region5
  $region4: #{_lambda_.1} parent=0 // pred_region
    _
  $region5: #{_lambda_.1} parent=0 // pred_fallthru
    _
  // Predicated region
  $region6: #{_lambda_.1} parent=0 // pred_check
    _
  $region7: #{_lambda_.1} parent=0 // pred_check_branch
    %13 = sbr.rel (0) target = $region9
  $region8: #{_lambda_.1} parent=0 // pred_region
    _
  $region9: #{_lambda_.1} parent=0 // pred_fallthru
    _
  // Predicated region
  $region10: #{_lambda_.1} parent=0 // pred_check
    _
  $region11: #{_lambda_.1} parent=0 // pred_check_branch
    %15 = sbr.rel (0) target = $region13
  $region12: #{_lambda_.1} parent=0 // pred_region
    _
  $region13: #{_lambda_.1} parent=0 // pred_fallthru
    _
  // Predicated region
  $region14: #{_lambda_.1} parent=0 // pred_check
    _
  $region15: #{_lambda_.1} parent=0 // pred_check_branch
    %17 = sbr.rel (0) target = $region17
  $region16: #{_lambda_.1} parent=0 // pred_region
    _
  $region17: #{_lambda_.1} parent=0 // pred_fallthru
    _
  // Predicated region
  $region18: #{_lambda_.1} parent=0 // pred_check
    _
  $region19: #{_lambda_.1} parent=0 // pred_check_branch
    %19 = sbr.rel (0) target = $region21
  $region20: #{_lambda_.1} parent=0 // pred_region
    _
  $region21: #{_lambda_.1} parent=0 // pred_fallthru
    _
  %v20 = vld [vmem:[%s0] sm:$0xff]
  %v21 = vld [vmem:[%s0 + $0x8] sm:$0xff]
  %v22 = vld [vmem:[%s0 + $0x10] sm:$0xf]
  %v23 = vld [vmem:[%s1] sm:$0xff]
  %v24 = vld [vmem:[%s1 + $0x8] sm:$0xff]
  %v25 = vld [vmem:[%s1 + $0x10] sm:$0xf]
  %v26 = vld [vmem:[%s2] sm:$0xff]
  %v27 = vld [vmem:[%s2 + $0x8] sm:$0xff]
  %v28 = vld [vmem:[%s2 + $0x10] sm:$0xff]
  %v29 = vld [vmem:[%s2 + $0x18] sm:$0xff]
  %v30 = vld [vmem:[%s2 + $0x20] sm:$0xff]
  %v31 = vld [vmem:[%s2 + $0x28] sm:$0xff]
  %v32 = vld [vmem:[%s2 + $0x30] sm:$0xff]
  %v33 = vld [vmem:[%s2 + $0x38] sm:$0xff]
  %vm34 = vcmask 261120
  %v36 = vsel %vm34, %v23, 0
  %v39 = vsel %vm34, %v24, 0
  %v42 = vsel %vm34, %v25, 0
  %44 = vmatprep.subr.mxu0 0.0
  %45 = vmatpush1.msra.mxu0 %v30
  %46 = vmatprep.subr.mxu0 0.0
  %47 = vmatpush1.msra.mxu0 %v31
  %48 = vmatprep.subr.mxu0 0.0
  %49 = vmatpush1.msra.mxu0 %v32
  %50 = vmatprep.subr.mxu0 0.0
  %51 = vmatpush1.msra.mxu0 %v33
  %52 = vmatprep.subr.mxu0 0.0
  %53 = vmatpush1.msra.mxu0 0.0
  %54 = vmatprep.subr.mxu0 0.0
  %55 = vmatpush1.msra.mxu0 0.0
  %56 = vmatprep.subr.mxu0 0.0
  %57 = vmatpush1.msra.mxu0 0.0
  %58 = vmatprep.subr.mxu0 0.0
  %59 = vmatpush1.msra.mxu0 0.0
  %60 = vmatprep.subr.mxu0 0.0
  %61 = vmatpush1.msra.mxu0 0.0
  %62 = vmatprep.subr.mxu0 0.0
  %63 = vmatpush1.msra.mxu0 0.0
  %64 = vmatprep.subr.mxu0 0.0
  %65 = vmatpush1.msra.mxu0 0.0
  %66 = vmatprep.subr.mxu0 0.0
  %67 = vmatpush1.msra.mxu0 0.0
  %68 = vmatprep.subr.mxu0 0.0
  %69 = vmatpush1.msra.mxu0 0.0
  %70 = vmatprep.subr.mxu0 0.0
  %71 = vmatpush1.msra.mxu0 0.0
  %72 = vmatprep.subr.mxu0 0.0
  %73 = vmatpush1.msra.mxu0 0.0
  %74 = vmatprep.subr.mxu0 0.0
  %75 = vmatpush1.msra.mxu0 0.0
  %76 = vmatprep.subr.mxu0 0.0
  %77 = vmatpush1.msra.mxu0 0.0
  %78 = vmatprep.subr.mxu0 0.0
  %79 = vmatpush1.msra.mxu0 0.0
  %80 = vmatprep.subr.mxu0 0.0
  %81 = vmatpush1.msra.mxu0 0.0
  %82 = vmatprep.subr.mxu0 0.0
  %83 = vmatpush1.msra.mxu0 0.0
  %84 = vmatprep.subr.mxu0 0.0
  %85 = vmatpush1.msra.mxu0 0.0
  %86 = vmatprep.subr.mxu0 0.0
  %87 = vmatpush1.msra.mxu0 0.0
  %88 = vmatprep.subr.mxu0 0.0
  %89 = vmatpush1.msra.mxu0 0.0
  %90 = vmatprep.subr.mxu0 0.0
  %91 = vmatpush1.msra.mxu0 0.0
  %92 = vmatprep.subr.mxu0 0.0
  %93 = vmatpush1.msra.mxu0 0.0
  %94 = vmatprep.subr.mxu0 0.0
  %95 = vmatpush1.msra.mxu0 0.0
  %96 = vmatprep.subr.mxu0 0.0
  %97 = vmatpush1.msra.mxu0 0.0
  %98 = vmatprep.subr.mxu0 0.0
  %99 = vmatpush1.msra.mxu0 0.0
  %100 = vmatprep.subr.mxu0 0.0
  %101 = vmatpush1.msra.mxu0 0.0
  %102 = vmatprep.subr.mxu0 0.0
  %103 = vmatpush1.msra.mxu0 0.0
  %104 = vmatprep.subr.mxu0 0.0
  %105 = vmatpush1.msra.mxu0 0.0
  %106 = vmatprep.subr.mxu0 0.0
  %107 = vmatpush1.msra.mxu0 0.0
  %108 = vmatprep.mubr.f32.mxu0 0.0
  %109 = vmatmul.mubr.f32.gmra.mrb[0].mxu0 %v36
  %v110 = vpop.f32.mrb[0].mxu0
  %v111 = vadd.f32 0.0, %v110
  %v112 = vpop.f32.mrb[0].mxu0
  %113 = vmatprep.mubr.f32.mxu0 0.0
  %114 = vmatmul.mubr.f32.gmra.mrb[0].mxu0 %v39
  %v115 = vpop.f32.mrb[0].mxu0
  %v116 = vadd.f32 0.0, %v115
  %v117 = vpop.f32.mrb[0].mxu0
  %118 = vmatprep.mubr.f32.mxu0 0.0
  %119 = vmatmul.mubr.f32.gmra.mrb[0].mxu0 %v42
  %v120 = vpop.f32.mrb[0].mxu0
  %v121 = vadd.f32 0.0, %v120
  %v122 = vpop.f32.mrb[0].mxu0
  %123 = vdwg.mxu0
  %v125 = vsel %vm34, %v20, 0
  %v128 = vsel %vm34, %v21, 0
  %v131 = vsel %vm34, %v22, 0
  %133 = vmatprep.subr.mxu0 0.0
  %134 = vmatpush1.msra.mxu0 %v26
  %135 = vmatprep.subr.mxu0 0.0
  %136 = vmatpush1.msra.mxu0 %v27
  %137 = vmatprep.subr.mxu0 0.0
  %138 = vmatpush1.msra.mxu0 %v28
  %139 = vmatprep.subr.mxu0 0.0
  %140 = vmatpush1.msra.mxu0 %v29
  %141 = vmatprep.subr.mxu0 0.0
  %142 = vmatpush1.msra.mxu0 0.0
  %143 = vmatprep.subr.mxu0 0.0
  %144 = vmatpush1.msra.mxu0 0.0
  %145 = vmatprep.subr.mxu0 0.0
  %146 = vmatpush1.msra.mxu0 0.0
  %147 = vmatprep.subr.mxu0 0.0
  %148 = vmatpush1.msra.mxu0 0.0
  %149 = vmatprep.subr.mxu0 0.0
  %150 = vmatpush1.msra.mxu0 0.0
  %151 = vmatprep.subr.mxu0 0.0
  %152 = vmatpush1.msra.mxu0 0.0
  %153 = vmatprep.subr.mxu0 0.0
  %154 = vmatpush1.msra.mxu0 0.0
  %155 = vmatprep.subr.mxu0 0.0
  %156 = vmatpush1.msra.mxu0 0.0
  %157 = vmatprep.subr.mxu0 0.0
  %158 = vmatpush1.msra.mxu0 0.0
  %159 = vmatprep.subr.mxu0 0.0
  %160 = vmatpush1.msra.mxu0 0.0
  %161 = vmatprep.subr.mxu0 0.0
  %162 = vmatpush1.msra.mxu0 0.0
  %163 = vmatprep.subr.mxu0 0.0
  %164 = vmatpush1.msra.mxu0 0.0
  %165 = vmatprep.subr.mxu0 0.0
  %166 = vmatpush1.msra.mxu0 0.0
  %167 = vmatprep.subr.mxu0 0.0
  %168 = vmatpush1.msra.mxu0 0.0
  %169 = vmatprep.subr.mxu0 0.0
  %170 = vmatpush1.msra.mxu0 0.0
  %171 = vmatprep.subr.mxu0 0.0
  %172 = vmatpush1.msra.mxu0 0.0
  %173 = vmatprep.subr.mxu0 0.0
  %174 = vmatpush1.msra.mxu0 0.0
  %175 = vmatprep.subr.mxu0 0.0
  %176 = vmatpush1.msra.mxu0 0.0
  %177 = vmatprep.subr.mxu0 0.0
  %178 = vmatpush1.msra.mxu0 0.0
  %179 = vmatprep.subr.mxu0 0.0
  %180 = vmatpush1.msra.mxu0 0.0
  %181 = vmatprep.subr.mxu0 0.0
  %182 = vmatpush1.msra.mxu0 0.0
  %183 = vmatprep.subr.mxu0 0.0
  %184 = vmatpush1.msra.mxu0 0.0
  %185 = vmatprep.subr.mxu0 0.0
  %186 = vmatpush1.msra.mxu0 0.0
  %187 = vmatprep.subr.mxu0 0.0
  %188 = vmatpush1.msra.mxu0 0.0
  %189 = vmatprep.subr.mxu0 0.0
  %190 = vmatpush1.msra.mxu0 0.0
  %191 = vmatprep.subr.mxu0 0.0
  %192 = vmatpush1.msra.mxu0 0.0
  %193 = vmatprep.subr.mxu0 0.0
  %194 = vmatpush1.msra.mxu0 0.0
  %195 = vmatprep.subr.mxu0 0.0
  %196 = vmatpush1.msra.mxu0 0.0
  %197 = vmatprep.mubr.f32.mxu0 0.0
  %198 = vmatmul.mubr.f32.gmra.mrb[0].mxu0 %v125
  %v199 = vpop.f32.mrb[0].mxu0
  %v200 = vadd.f32 %v111, %v199
  %v201 = vpop.f32.mrb[0].mxu0
  %202 = vmatprep.mubr.f32.mxu0 0.0
  %203 = vmatmul.mubr.f32.gmra.mrb[0].mxu0 %v128
  %v204 = vpop.f32.mrb[0].mxu0
  %v205 = vadd.f32 %v116, %v204
  %v206 = vpop.f32.mrb[0].mxu0
  %207 = vmatprep.mubr.f32.mxu0 0.0
  %208 = vmatmul.mubr.f32.gmra.mrb[0].mxu0 %v131
  %v209 = vpop.f32.mrb[0].mxu0
  %v210 = vadd.f32 %v121, %v209
  %v211 = vpop.f32.mrb[0].mxu0
  %212 = vdwg.mxu0
  %v213 = vld [vmem:[%s2 + $0x40] sm:$0x1]
  %v214 = vlaneseq
  %v215 = vshrl.u32 %v214, 7
  %v216 = vsub.s32 0, %v215
  %v217 = vrot.slane %v213, %v216
  %v218 = vadd.f32 %v200, %v217
  %v219 = vadd.f32 %v205, %v217
  %v220 = vadd.f32 %v210, %v217
  %vm221 = vcmask 523264
  %222 = vst.msk [vmem:[#allocation2] sm:$0xff] %vm221, %v218
  %223 = vst.msk [vmem:[#allocation2 + $0x8] sm:$0xff] %vm221, %v219
  %vm224 = vcmask 519168
  %225 = vst.msk [vmem:[#allocation2 + $0x10] sm:$0xf] %vm224, %v220
  %v226 = vld [vmem:[%s2 + $0x48] sm:$0xff]
  %v227 = vld [vmem:[%s2 + $0x50] sm:$0xff]
  %v228 = vld [vmem:[%s2 + $0x58] sm:$0xff]
  %v229 = vld [vmem:[%s2 + $0x60] sm:$0xff]
  %v230 = vld [vmem:[%s2 + $0x68] sm:$0x1]
  %v231 = vlaneseq
  %v232 = vshrl.u32 %v231, 7
  %v233 = vsub.s32 0, %v232
  %v234 = vrot.slane %v230, %v233
  %235 = vmatprep.subr.mxu0 0.0
  %236 = vmatpush1.msra.mxu0 %v226
  %237 = vmatprep.subr.mxu0 0.0
  %238 = vmatpush1.msra.mxu0 %v227
  %239 = vmatprep.subr.mxu0 0.0
  %240 = vmatpush1.msra.mxu0 %v228
  %241 = vmatprep.subr.mxu0 0.0
  %242 = vmatpush1.msra.mxu0 %v229
  %243 = vmatprep.subr.mxu0 0.0
  %244 = vmatpush1.msra.mxu0 0.0
  %245 = vmatprep.subr.mxu0 0.0
  %246 = vmatpush1.msra.mxu0 0.0
  %247 = vmatprep.subr.mxu0 0.0
  %248 = vmatpush1.msra.mxu0 0.0
  %249 = vmatprep.subr.mxu0 0.0
  %250 = vmatpush1.msra.mxu0 0.0
  %251 = vmatprep.subr.mxu0 0.0
  %252 = vmatpush1.msra.mxu0 0.0
  %253 = vmatprep.subr.mxu0 0.0
  %254 = vmatpush1.msra.mxu0 0.0
  %255 = vmatprep.subr.mxu0 0.0
  %256 = vmatpush1.msra.mxu0 0.0
  %257 = vmatprep.subr.mxu0 0.0
  %258 = vmatpush1.msra.mxu0 0.0
  %259 = vmatprep.subr.mxu0 0.0
  %260 = vmatpush1.msra.mxu0 0.0
  %261 = vmatprep.subr.mxu0 0.0
  %262 = vmatpush1.msra.mxu0 0.0
  %263 = vmatprep.subr.mxu0 0.0
  %264 = vmatpush1.msra.mxu0 0.0
  %265 = vmatprep.subr.mxu0 0.0
  %266 = vmatpush1.msra.mxu0 0.0
  %267 = vmatprep.subr.mxu0 0.0
  %268 = vmatpush1.msra.mxu0 0.0
  %269 = vmatprep.subr.mxu0 0.0
  %270 = vmatpush1.msra.mxu0 0.0
  %271 = vmatprep.subr.mxu0 0.0
  %272 = vmatpush1.msra.mxu0 0.0
  %273 = vmatprep.subr.mxu0 0.0
  %274 = vmatpush1.msra.mxu0 0.0
  %275 = vmatprep.subr.mxu0 0.0
  %276 = vmatpush1.msra.mxu0 0.0
  %277 = vmatprep.subr.mxu0 0.0
  %278 = vmatpush1.msra.mxu0 0.0
  %279 = vmatprep.subr.mxu0 0.0
  %280 = vmatpush1.msra.mxu0 0.0
  %281 = vmatprep.subr.mxu0 0.0
  %282 = vmatpush1.msra.mxu0 0.0
  %283 = vmatprep.subr.mxu0 0.0
  %284 = vmatpush1.msra.mxu0 0.0
  %285 = vmatprep.subr.mxu0 0.0
  %286 = vmatpush1.msra.mxu0 0.0
  %287 = vmatprep.subr.mxu0 0.0
  %288 = vmatpush1.msra.mxu0 0.0
  %289 = vmatprep.subr.mxu0 0.0
  %290 = vmatpush1.msra.mxu0 0.0
  %291 = vmatprep.subr.mxu0 0.0
  %292 = vmatpush1.msra.mxu0 0.0
  %293 = vmatprep.subr.mxu0 0.0
  %294 = vmatpush1.msra.mxu0 0.0
  %295 = vmatprep.subr.mxu0 0.0
  %296 = vmatpush1.msra.mxu0 0.0
  %297 = vmatprep.subr.mxu0 0.0
  %298 = vmatpush1.msra.mxu0 0.0
  %299 = vmatprep.mubr.f32.mxu0 0.0
  %300 = vmatmul.mubr.f32.gmra.mrb[0].mxu0 %v125
  %v301 = vpop.f32.mrb[0].mxu0
  %v302 = vadd.f32 %v234, %v301
  %v303 = vpop.f32.mrb[0].mxu0
  %304 = vmatprep.mubr.f32.mxu0 0.0
  %305 = vmatmul.mubr.f32.gmra.mrb[0].mxu0 %v128
  %v306 = vpop.f32.mrb[0].mxu0
  %v307 = vadd.f32 %v234, %v306
  %v308 = vpop.f32.mrb[0].mxu0
  %309 = vmatprep.mubr.f32.mxu0 0.0
  %310 = vmatmul.mubr.f32.gmra.mrb[0].mxu0 %v131
  %v311 = vpop.f32.mrb[0].mxu0
  %v312 = vadd.f32 %v234, %v311
  %v313 = vpop.f32.mrb[0].mxu0
  %314 = vdwg.mxu0
  %315 = vst.msk [vmem:[#allocation3] sm:$0xff] %vm34, %v302
  %316 = vst.msk [vmem:[#allocation3 + $0x8] sm:$0xff] %vm34, %v307
  %vm317 = vcmask 257024
  %318 = vst.msk [vmem:[#allocation3 + $0x10] sm:$0xf] %vm317, %v312
  %v319 = vld [vmem:[%s2 + $0x70] sm:$0xff]
  %v320 = vld [vmem:[%s2 + $0x78] sm:$0xff]
  %v321 = vld [vmem:[%s2 + $0x80] sm:$0xff]
  %v322 = vld [vmem:[%s2 + $0x88] sm:$0xff]
  %v323 = vld [vmem:[%s2 + $0x90] sm:$0x1]
  %v324 = vlaneseq
  %v325 = vshrl.u32 %v324, 7
  %v326 = vsub.s32 0, %v325
  %v327 = vrot.slane %v323, %v326
  %328 = vmatprep.subr.mxu0 0.0
  %329 = vmatpush1.msra.mxu0 %v319
  %330 = vmatprep.subr.mxu0 0.0
  %331 = vmatpush1.msra.mxu0 %v320
  %332 = vmatprep.subr.mxu0 0.0
  %333 = vmatpush1.msra.mxu0 %v321
  %334 = vmatprep.subr.mxu0 0.0
  %335 = vmatpush1.msra.mxu0 %v322
  %336 = vmatprep.subr.mxu0 0.0
  %337 = vmatpush1.msra.mxu0 0.0
  %338 = vmatprep.subr.mxu0 0.0
  %339 = vmatpush1.msra.mxu0 0.0
  %340 = vmatprep.subr.mxu0 0.0
  %341 = vmatpush1.msra.mxu0 0.0
  %342 = vmatprep.subr.mxu0 0.0
  %343 = vmatpush1.msra.mxu0 0.0
  %344 = vmatprep.subr.mxu0 0.0
  %345 = vmatpush1.msra.mxu0 0.0
  %346 = vmatprep.subr.mxu0 0.0
  %347 = vmatpush1.msra.mxu0 0.0
  %348 = vmatprep.subr.mxu0 0.0
  %349 = vmatpush1.msra.mxu0 0.0
  %350 = vmatprep.subr.mxu0 0.0
  %351 = vmatpush1.msra.mxu0 0.0
  %352 = vmatprep.subr.mxu0 0.0
  %353 = vmatpush1.msra.mxu0 0.0
  %354 = vmatprep.subr.mxu0 0.0
  %355 = vmatpush1.msra.mxu0 0.0
  %356 = vmatprep.subr.mxu0 0.0
  %357 = vmatpush1.msra.mxu0 0.0
  %358 = vmatprep.subr.mxu0 0.0
  %359 = vmatpush1.msra.mxu0 0.0
  %360 = vmatprep.subr.mxu0 0.0
  %361 = vmatpush1.msra.mxu0 0.0
  %362 = vmatprep.subr.mxu0 0.0
  %363 = vmatpush1.msra.mxu0 0.0
  %364 = vmatprep.subr.mxu0 0.0
  %365 = vmatpush1.msra.mxu0 0.0
  %366 = vmatprep.subr.mxu0 0.0
  %367 = vmatpush1.msra.mxu0 0.0
  %368 = vmatprep.subr.mxu0 0.0
  %369 = vmatpush1.msra.mxu0 0.0
  %370 = vmatprep.subr.mxu0 0.0
  %371 = vmatpush1.msra.mxu0 0.0
  %372 = vmatprep.subr.mxu0 0.0
  %373 = vmatpush1.msra.mxu0 0.0
  %374 = vmatprep.subr.mxu0 0.0
  %375 = vmatpush1.msra.mxu0 0.0
  %376 = vmatprep.subr.mxu0 0.0
  %377 = vmatpush1.msra.mxu0 0.0
  %378 = vmatprep.subr.mxu0 0.0
  %379 = vmatpush1.msra.mxu0 0.0
  %380 = vmatprep.subr.mxu0 0.0
  %381 = vmatpush1.msra.mxu0 0.0
  %382 = vmatprep.subr.mxu0 0.0
  %383 = vmatpush1.msra.mxu0 0.0
  %384 = vmatprep.subr.mxu0 0.0
  %385 = vmatpush1.msra.mxu0 0.0
  %386 = vmatprep.subr.mxu0 0.0
  %387 = vmatpush1.msra.mxu0 0.0
  %388 = vmatprep.subr.mxu0 0.0
  %389 = vmatpush1.msra.mxu0 0.0
  %390 = vmatprep.subr.mxu0 0.0
  %391 = vmatpush1.msra.mxu0 0.0
  %392 = vmatprep.mubr.f32.mxu0 0.0
  %393 = vmatmul.mubr.f32.gmra.mrb[0].mxu0 %v36
  %v394 = vpop.f32.mrb[0].mxu0
  %v395 = vadd.f32 %v327, %v394
  %v396 = vpop.f32.mrb[0].mxu0
  %397 = vmatprep.mubr.f32.mxu0 0.0
  %398 = vmatmul.mubr.f32.gmra.mrb[0].mxu0 %v39
  %v399 = vpop.f32.mrb[0].mxu0
  %v400 = vadd.f32 %v327, %v399
  %v401 = vpop.f32.mrb[0].mxu0
  %402 = vmatprep.mubr.f32.mxu0 0.0
  %403 = vmatmul.mubr.f32.gmra.mrb[0].mxu0 %v42
  %v404 = vpop.f32.mrb[0].mxu0
  %v405 = vadd.f32 %v327, %v404
  %v406 = vpop.f32.mrb[0].mxu0
  %407 = vdwg.mxu0
  %408 = vst.msk [vmem:[#allocation4] sm:$0xff] %vm34, %v395
  %409 = vst.msk [vmem:[#allocation4 + $0x8] sm:$0xff] %vm34, %v400
  %410 = vst.msk [vmem:[#allocation4 + $0x10] sm:$0xf] %vm317, %v405
  %411 = vxpose.xlu0.b32.start [1/16] %v20, 128
  %412 = vxpose.xlu0.b32.cont [2/16] %v21, 128
  %413 = vxpose.xlu0.b32.cont [3/16] %v22, 128
  %414 = vxpose.xlu0.b32.cont [4/16] 0.0, 128
  %415 = vxpose.xlu0.b32.cont [5/16] 0.0, 128
  %416 = vxpose.xlu0.b32.cont [6/16] 0.0, 128
  %417 = vxpose.xlu0.b32.cont [7/16] 0.0, 128
  %418 = vxpose.xlu0.b32.cont [8/16] 0.0, 128
  %419 = vxpose.xlu0.b32.cont [9/16] 0.0, 128
  %420 = vxpose.xlu0.b32.cont [10/16] 0.0, 128
  %421 = vxpose.xlu0.b32.cont [11/16] 0.0, 128
  %422 = vxpose.xlu0.b32.cont [12/16] 0.0, 128
  %423 = vxpose.xlu0.b32.cont [13/16] 0.0, 128
  %424 = vxpose.xlu0.b32.cont [14/16] 0.0, 128
  %425 = vxpose.xlu0.b32.cont [15/16] 0.0, 128
  %426 = vxpose.xlu0.b32.end [16/16] 0.0, 128
  %v427 = vpop.trf.xlu0
  %v428 = vpop.trf.xlu0
  %v429 = vpop.trf.xlu0
  %v430 = vpop.trf.xlu0
  %v431 = vpop.trf.xlu0
  %v432 = vpop.trf.xlu0
  %v433 = vpop.trf.xlu0
  %v434 = vpop.trf.xlu0
  %v435 = vpop.trf.xlu0
  %v436 = vpop.trf.xlu0
  %v437 = vpop.trf.xlu0
  %v438 = vpop.trf.xlu0
  %v439 = vpop.trf.xlu0
  %v440 = vpop.trf.xlu0
  %v441 = vpop.trf.xlu0
  %v442 = vpop.trf.xlu0
  %v443 = vld [vmem:[%s3] sm:$0xff]
  %v444 = vld [vmem:[%s3 + $0x8] sm:$0xff]
  %v445 = vld [vmem:[%s3 + $0x10] sm:$0xf]
  %v446 = vld [vmem:[%s4] sm:$0x1]
  %v448 = vlaneseq
  %v449 = vshrl.u32 %v448, 7
  %v450 = vsub.s32 0, %v449
  %v451 = vrot.slane %v446, %v450
  %vm453 = vcmask 162816
  %v455 = vsel %vm453, %v427, 0
  %v458 = vsel %vm453, %v428, 0
  %v461 = vsel %vm453, %v429, 0
  %v464 = vsel %vm453, %v430, 0
  %vm466 = vcmask 1043456
  %v468 = vsel %vm466, %v445, 0
  %470 = vmatprep.subr.mxu0 0.0
  %471 = vmatpush1.msra.mxu0 %v443
  %472 = vmatprep.subr.mxu0 0.0
  %473 = vmatpush1.msra.mxu0 %v444
  %474 = vmatprep.subr.mxu0 0.0
  %475 = vmatpush1.msra.mxu0 %v468
  %476 = vmatprep.subr.mxu0 0.0
  %477 = vmatpush1.msra.mxu0 0.0
  %478 = vmatprep.subr.mxu0 0.0
  %479 = vmatpush1.msra.mxu0 0.0
  %480 = vmatprep.subr.mxu0 0.0
  %481 = vmatpush1.msra.mxu0 0.0
  %482 = vmatprep.subr.mxu0 0.0
  %483 = vmatpush1.msra.mxu0 0.0
  %484 = vmatprep.subr.mxu0 0.0
  %485 = vmatpush1.msra.mxu0 0.0
  %486 = vmatprep.subr.mxu0 0.0
  %487 = vmatpush1.msra.mxu0 0.0
  %488 = vmatprep.subr.mxu0 0.0
  %489 = vmatpush1.msra.mxu0 0.0
  %490 = vmatprep.subr.mxu0 0.0
  %491 = vmatpush1.msra.mxu0 0.0
  %492 = vmatprep.subr.mxu0 0.0
  %493 = vmatpush1.msra.mxu0 0.0
  %494 = vmatprep.subr.mxu0 0.0
  %495 = vmatpush1.msra.mxu0 0.0
  %496 = vmatprep.subr.mxu0 0.0
  %497 = vmatpush1.msra.mxu0 0.0
  %498 = vmatprep.subr.mxu0 0.0
  %499 = vmatpush1.msra.mxu0 0.0
  %500 = vmatprep.subr.mxu0 0.0
  %501 = vmatpush1.msra.mxu0 0.0
  %502 = vmatprep.subr.mxu0 0.0
  %503 = vmatpush1.msra.mxu0 0.0
  %504 = vmatprep.subr.mxu0 0.0
  %505 = vmatpush1.msra.mxu0 0.0
  %506 = vmatprep.subr.mxu0 0.0
  %507 = vmatpush1.msra.mxu0 0.0
  %508 = vmatprep.subr.mxu0 0.0
  %509 = vmatpush1.msra.mxu0 0.0
  %510 = vmatprep.subr.mxu0 0.0
  %511 = vmatpush1.msra.mxu0 0.0
  %512 = vmatprep.subr.mxu0 0.0
  %513 = vmatpush1.msra.mxu0 0.0
  %514 = vmatprep.subr.mxu0 0.0
  %515 = vmatpush1.msra.mxu0 0.0
  %516 = vmatprep.subr.mxu0 0.0
  %517 = vmatpush1.msra.mxu0 0.0
  %518 = vmatprep.subr.mxu0 0.0
  %519 = vmatpush1.msra.mxu0 0.0
  %520 = vmatprep.subr.mxu0 0.0
  %521 = vmatpush1.msra.mxu0 0.0
  %522 = vmatprep.subr.mxu0 0.0
  %523 = vmatpush1.msra.mxu0 0.0
  %524 = vmatprep.subr.mxu0 0.0
  %525 = vmatpush1.msra.mxu0 0.0
  %526 = vmatprep.subr.mxu0 0.0
  %527 = vmatpush1.msra.mxu0 0.0
  %528 = vmatprep.subr.mxu0 0.0
  %529 = vmatpush1.msra.mxu0 0.0
  %530 = vmatprep.subr.mxu0 0.0
  %531 = vmatpush1.msra.mxu0 0.0
  %532 = vmatprep.subr.mxu0 0.0
  %533 = vmatpush1.msra.mxu0 0.0
  %534 = vmatprep.mubr.f32.mxu0 0.0
  %535 = vmatmul.mubr.f32.gmra.mrb[0].mxu0 %v455
  %v536 = vpop.f32.mrb[0].mxu0
  %v537 = vadd.f32 %v451, %v536
  %v538 = vpop.f32.mrb[0].mxu0
  %539 = vmatprep.mubr.f32.mxu0 0.0
  %540 = vmatmul.mubr.f32.gmra.mrb[0].mxu0 %v458
  %v541 = vpop.f32.mrb[0].mxu0
  %v542 = vadd.f32 %v451, %v541
  %v543 = vpop.f32.mrb[0].mxu0
  %544 = vmatprep.mubr.f32.mxu0 0.0
  %545 = vmatmul.mubr.f32.gmra.mrb[0].mxu0 %v461
  %v546 = vpop.f32.mrb[0].mxu0
  %v547 = vadd.f32 %v451, %v546
  %v548 = vpop.f32.mrb[0].mxu0
  %549 = vmatprep.mubr.f32.mxu0 0.0
  %550 = vmatmul.mubr.f32.gmra.mrb[0].mxu0 %v464
  %v551 = vpop.f32.mrb[0].mxu0
  %v552 = vadd.f32 %v451, %v551
  %v553 = vpop.f32.mrb[0].mxu0
  %554 = vdwg.mxu0
  %555 = vst.msk [vmem:[#allocation5] sm:$0xff] %vm453, %v537
  %556 = vst.msk [vmem:[#allocation5 + $0x8] sm:$0xff] %vm453, %v542
  %557 = vst.msk [vmem:[#allocation5 + $0x10] sm:$0xff] %vm453, %v547
  %558 = vst.msk [vmem:[#allocation5 + $0x18] sm:$0xff] %vm453, %v552
  %559 = vxpose.xlu0.b32.start [1/16] %v23, 128
  %560 = vxpose.xlu0.b32.cont [2/16] %v24, 128
  %561 = vxpose.xlu0.b32.cont [3/16] %v25, 128
  %562 = vxpose.xlu0.b32.cont [4/16] 0.0, 128
  %563 = vxpose.xlu0.b32.cont [5/16] 0.0, 128
  %564 = vxpose.xlu0.b32.cont [6/16] 0.0, 128
  %565 = vxpose.xlu0.b32.cont [7/16] 0.0, 128
  %566 = vxpose.xlu0.b32.cont [8/16] 0.0, 128
  %567 = vxpose.xlu0.b32.cont [9/16] 0.0, 128
  %568 = vxpose.xlu0.b32.cont [10/16] 0.0, 128
  %569 = vxpose.xlu0.b32.cont [11/16] 0.0, 128
  %570 = vxpose.xlu0.b32.cont [12/16] 0.0, 128
  %571 = vxpose.xlu0.b32.cont [13/16] 0.0, 128
  %572 = vxpose.xlu0.b32.cont [14/16] 0.0, 128
  %573 = vxpose.xlu0.b32.cont [15/16] 0.0, 128
  %574 = vxpose.xlu0.b32.end [16/16] 0.0, 128
  %v575 = vpop.trf.xlu0
  %v576 = vpop.trf.xlu0
  %v577 = vpop.trf.xlu0
  %v578 = vpop.trf.xlu0
  %v579 = vpop.trf.xlu0
  %v580 = vpop.trf.xlu0
  %v581 = vpop.trf.xlu0
  %v582 = vpop.trf.xlu0
  %v583 = vpop.trf.xlu0
  %v584 = vpop.trf.xlu0
  %v585 = vpop.trf.xlu0
  %v586 = vpop.trf.xlu0
  %v587 = vpop.trf.xlu0
  %v588 = vpop.trf.xlu0
  %v589 = vpop.trf.xlu0
  %v590 = vpop.trf.xlu0
  %s591 = scalar_lea.vmem %s3, 24
  %v592 = vld [vmem:[%s591] sm:$0xff]
  %v593 = vld [vmem:[%s591 + $0x8] sm:$0xff]
  %v594 = vld [vmem:[%s591 + $0x10] sm:$0xf]
  %s595 = scalar_lea.vmem %s4, 1
  %v596 = vld [vmem:[%s595] sm:$0x1]
  %v598 = vlaneseq
  %v599 = vshrl.u32 %v598, 7
  %v600 = vsub.s32 0, %v599
  %v601 = vrot.slane %v596, %v600
  %v604 = vsel %vm453, %v575, 0
  %v607 = vsel %vm453, %v576, 0
  %v610 = vsel %vm453, %v577, 0
  %v613 = vsel %vm453, %v578, 0
  %v616 = vsel %vm466, %v594, 0
  %618 = vmatprep.subr.mxu0 0.0
  %619 = vmatpush1.msra.mxu0 %v592
  %620 = vmatprep.subr.mxu0 0.0
  %621 = vmatpush1.msra.mxu0 %v593
  %622 = vmatprep.subr.mxu0 0.0
  %623 = vmatpush1.msra.mxu0 %v616
  %624 = vmatprep.subr.mxu0 0.0
  %625 = vmatpush1.msra.mxu0 0.0
  %626 = vmatprep.subr.mxu0 0.0
  %627 = vmatpush1.msra.mxu0 0.0
  %628 = vmatprep.subr.mxu0 0.0
  %629 = vmatpush1.msra.mxu0 0.0
  %630 = vmatprep.subr.mxu0 0.0
  %631 = vmatpush1.msra.mxu0 0.0
  %632 = vmatprep.subr.mxu0 0.0
  %633 = vmatpush1.msra.mxu0 0.0
  %634 = vmatprep.subr.mxu0 0.0
  %635 = vmatpush1.msra.mxu0 0.0
  %636 = vmatprep.subr.mxu0 0.0
  %637 = vmatpush1.msra.mxu0 0.0
  %638 = vmatprep.subr.mxu0 0.0
  %639 = vmatpush1.msra.mxu0 0.0
  %640 = vmatprep.subr.mxu0 0.0
  %641 = vmatpush1.msra.mxu0 0.0
  %642 = vmatprep.subr.mxu0 0.0
  %643 = vmatpush1.msra.mxu0 0.0
  %644 = vmatprep.subr.mxu0 0.0
  %645 = vmatpush1.msra.mxu0 0.0
  %646 = vmatprep.subr.mxu0 0.0
  %647 = vmatpush1.msra.mxu0 0.0
  %648 = vmatprep.subr.mxu0 0.0
  %649 = vmatpush1.msra.mxu0 0.0
  %650 = vmatprep.subr.mxu0 0.0
  %651 = vmatpush1.msra.mxu0 0.0
  %652 = vmatprep.subr.mxu0 0.0
  %653 = vmatpush1.msra.mxu0 0.0
  %654 = vmatprep.subr.mxu0 0.0
  %655 = vmatpush1.msra.mxu0 0.0
  %656 = vmatprep.subr.mxu0 0.0
  %657 = vmatpush1.msra.mxu0 0.0
  %658 = vmatprep.subr.mxu0 0.0
  %659 = vmatpush1.msra.mxu0 0.0
  %660 = vmatprep.subr.mxu0 0.0
  %661 = vmatpush1.msra.mxu0 0.0
  %662 = vmatprep.subr.mxu0 0.0
  %663 = vmatpush1.msra.mxu0 0.0
  %664 = vmatprep.subr.mxu0 0.0
  %665 = vmatpush1.msra.mxu0 0.0
  %666 = vmatprep.subr.mxu0 0.0
  %667 = vmatpush1.msra.mxu0 0.0
  %668 = vmatprep.subr.mxu0 0.0
  %669 = vmatpush1.msra.mxu0 0.0
  %670 = vmatprep.subr.mxu0 0.0
  %671 = vmatpush1.msra.mxu0 0.0
  %672 = vmatprep.subr.mxu0 0.0
  %673 = vmatpush1.msra.mxu0 0.0
  %674 = vmatprep.subr.mxu0 0.0
  %675 = vmatpush1.msra.mxu0 0.0
  %676 = vmatprep.subr.mxu0 0.0
  %677 = vmatpush1.msra.mxu0 0.0
  %678 = vmatprep.subr.mxu0 0.0
  %679 = vmatpush1.msra.mxu0 0.0
  %680 = vmatprep.subr.mxu0 0.0
  %681 = vmatpush1.msra.mxu0 0.0
  %682 = vmatprep.mubr.f32.mxu0 0.0
  %683 = vmatmul.mubr.f32.gmra.mrb[0].mxu0 %v604
  %v684 = vpop.f32.mrb[0].mxu0
  %v685 = vadd.f32 %v601, %v684
  %v686 = vpop.f32.mrb[0].mxu0
  %687 = vmatprep.mubr.f32.mxu0 0.0
  %688 = vmatmul.mubr.f32.gmra.mrb[0].mxu0 %v607
  %v689 = vpop.f32.mrb[0].mxu0
  %v690 = vadd.f32 %v601, %v689
  %v691 = vpop.f32.mrb[0].mxu0
  %692 = vmatprep.mubr.f32.mxu0 0.0
  %693 = vmatmul.mubr.f32.gmra.mrb[0].mxu0 %v610
  %v694 = vpop.f32.mrb[0].mxu0
  %v695 = vadd.f32 %v601, %v694
  %v696 = vpop.f32.mrb[0].mxu0
  %697 = vmatprep.mubr.f32.mxu0 0.0
  %698 = vmatmul.mubr.f32.gmra.mrb[0].mxu0 %v613
  %v699 = vpop.f32.mrb[0].mxu0
  %v700 = vadd.f32 %v601, %v699
  %v701 = vpop.f32.mrb[0].mxu0
  %702 = vdwg.mxu0
  %703 = vst.msk [vmem:[#allocation5 + $0x20] sm:$0xff] %vm453, %v685
  %704 = vst.msk [vmem:[#allocation5 + $0x28] sm:$0xff] %vm453, %v690
  %705 = vst.msk [vmem:[#allocation5 + $0x30] sm:$0xff] %vm453, %v695
  %706 = vst.msk [vmem:[#allocation5 + $0x38] sm:$0xff] %vm453, %v700
  %v707 = vld [vmem:[#allocation2] sm:$0xff]
  %v708 = vld [vmem:[#allocation2 + $0x8] sm:$0x3]
  %v709 = vld [vmem:[#allocation5] sm:$0xff]
  %v710 = vld [vmem:[#allocation5 + $0x8] sm:$0xff]
  %v711 = vld [vmem:[#allocation5 + $0x10] sm:$0xff]
  %v712 = vld [vmem:[#allocation5 + $0x18] sm:$0xff]
  %v713 = vld [vmem:[#allocation5 + $0x20] sm:$0xff]
  %v714 = vld [vmem:[#allocation5 + $0x28] sm:$0xff]
  %v715 = vld [vmem:[#allocation5 + $0x30] sm:$0xff]
  %v716 = vld [vmem:[#allocation5 + $0x38] sm:$0xff]
  %vm717 = vcmask 80896
  %v719 = vsel %vm717, %v709, 0
  %v722 = vsel %vm717, %v710, 0
  %v725 = vsel %vm717, %v711, 0
  %v728 = vsel %vm717, %v712, 0
  %v731 = vsel %vm717, %v713, 0
  %v734 = vsel %vm717, %v714, 0
  %v737 = vsel %vm717, %v715, 0
  %v740 = vsel %vm717, %v716, 0
  %vm742 = vcmask 1041408
  %v744 = vsel %vm742, %v708, 0
  %746 = vmatprep.subr.mxu0 0.0
  %747 = vmatpush1.msra.mxu0 %v707
  %748 = vmatprep.subr.mxu0 0.0
  %749 = vmatpush1.msra.mxu0 %v744
  %750 = vmatprep.subr.mxu0 0.0
  %751 = vmatpush1.msra.mxu0 0.0
  %752 = vmatprep.subr.mxu0 0.0
  %753 = vmatpush1.msra.mxu0 0.0
  %754 = vmatprep.subr.mxu0 0.0
  %755 = vmatpush1.msra.mxu0 0.0
  %756 = vmatprep.subr.mxu0 0.0
  %757 = vmatpush1.msra.mxu0 0.0
  %758 = vmatprep.subr.mxu0 0.0
  %759 = vmatpush1.msra.mxu0 0.0
  %760 = vmatprep.subr.mxu0 0.0
  %761 = vmatpush1.msra.mxu0 0.0
  %762 = vmatprep.subr.mxu0 0.0
  %763 = vmatpush1.msra.mxu0 0.0
  %764 = vmatprep.subr.mxu0 0.0
  %765 = vmatpush1.msra.mxu0 0.0
  %766 = vmatprep.subr.mxu0 0.0
  %767 = vmatpush1.msra.mxu0 0.0
  %768 = vmatprep.subr.mxu0 0.0
  %769 = vmatpush1.msra.mxu0 0.0
  %770 = vmatprep.subr.mxu0 0.0
  %771 = vmatpush1.msra.mxu0 0.0
  %772 = vmatprep.subr.mxu0 0.0
  %773 = vmatpush1.msra.mxu0 0.0
  %774 = vmatprep.subr.mxu0 0.0
  %775 = vmatpush1.msra.mxu0 0.0
  %776 = vmatprep.subr.mxu0 0.0
  %777 = vmatpush1.msra.mxu0 0.0
  %778 = vmatprep.subr.mxu0 0.0
  %779 = vmatpush1.msra.mxu0 0.0
  %780 = vmatprep.subr.mxu0 0.0
  %781 = vmatpush1.msra.mxu0 0.0
  %782 = vmatprep.subr.mxu0 0.0
  %783 = vmatpush1.msra.mxu0 0.0
  %784 = vmatprep.subr.mxu0 0.0
  %785 = vmatpush1.msra.mxu0 0.0
  %786 = vmatprep.subr.mxu0 0.0
  %787 = vmatpush1.msra.mxu0 0.0
  %788 = vmatprep.subr.mxu0 0.0
  %789 = vmatpush1.msra.mxu0 0.0
  %790 = vmatprep.subr.mxu0 0.0
  %791 = vmatpush1.msra.mxu0 0.0
  %792 = vmatprep.subr.mxu0 0.0
  %793 = vmatpush1.msra.mxu0 0.0
  %794 = vmatprep.subr.mxu0 0.0
  %795 = vmatpush1.msra.mxu0 0.0
  %796 = vmatprep.subr.mxu0 0.0
  %797 = vmatpush1.msra.mxu0 0.0
  %798 = vmatprep.subr.mxu0 0.0
  %799 = vmatpush1.msra.mxu0 0.0
  %800 = vmatprep.subr.mxu0 0.0
  %801 = vmatpush1.msra.mxu0 0.0
  %802 = vmatprep.subr.mxu0 0.0
  %803 = vmatpush1.msra.mxu0 0.0
  %804 = vmatprep.subr.mxu0 0.0
  %805 = vmatpush1.msra.mxu0 0.0
  %806 = vmatprep.subr.mxu0 0.0
  %807 = vmatpush1.msra.mxu0 0.0
  %808 = vmatprep.subr.mxu0 0.0
  %809 = vmatpush1.msra.mxu0 0.0
  %810 = vmatprep.mubr.f32.mxu0 0.0
  %811 = vmatmul.mubr.f32.gmra.mrb[0].mxu0 %v719
  %v812 = vpop.f32.mrb[0].mxu0
  %v813 = vadd.f32 0.0, %v812
  %v814 = vpop.f32.mrb[0].mxu0
  %815 = vmatprep.mubr.f32.mxu0 0.0
  %816 = vmatmul.mubr.f32.gmra.mrb[0].mxu0 %v722
  %v817 = vpop.f32.mrb[0].mxu0
  %v818 = vadd.f32 0.0, %v817
  %v819 = vpop.f32.mrb[0].mxu0
  %820 = vmatprep.mubr.f32.mxu0 0.0
  %821 = vmatmul.mubr.f32.gmra.mrb[0].mxu0 %v725
  %v822 = vpop.f32.mrb[0].mxu0
  %v823 = vadd.f32 0.0, %v822
  %v824 = vpop.f32.mrb[0].mxu0
  %825 = vmatprep.mubr.f32.mxu0 0.0
  %826 = vmatmul.mubr.f32.gmra.mrb[0].mxu0 %v728
  %v827 = vpop.f32.mrb[0].mxu0
  %v828 = vadd.f32 0.0, %v827
  %v829 = vpop.f32.mrb[0].mxu0
  %830 = vmatprep.mubr.f32.mxu0 0.0
  %831 = vmatmul.mubr.f32.gmra.mrb[0].mxu0 %v731
  %v832 = vpop.f32.mrb[0].mxu0
  %v833 = vadd.f32 0.0, %v832
  %v834 = vpop.f32.mrb[0].mxu0
  %835 = vmatprep.mubr.f32.mxu0 0.0
  %836 = vmatmul.mubr.f32.gmra.mrb[0].mxu0 %v734
  %v837 = vpop.f32.mrb[0].mxu0
  %v838 = vadd.f32 0.0, %v837
  %v839 = vpop.f32.mrb[0].mxu0
  %840 = vmatprep.mubr.f32.mxu0 0.0
  %841 = vmatmul.mubr.f32.gmra.mrb[0].mxu0 %v737
  %v842 = vpop.f32.mrb[0].mxu0
  %v843 = vadd.f32 0.0, %v842
  %v844 = vpop.f32.mrb[0].mxu0
  %845 = vmatprep.mubr.f32.mxu0 0.0
  %846 = vmatmul.mubr.f32.gmra.mrb[0].mxu0 %v740
  %v847 = vpop.f32.mrb[0].mxu0
  %v848 = vadd.f32 0.0, %v847
  %v849 = vpop.f32.mrb[0].mxu0
  %850 = vdwg.mxu0
  %v851 = vtanh.pop %v813
  %v852 = vtanh.pop %v818
  %v853 = vtanh.pop %v823
  %v854 = vtanh.pop %v828
  %v855 = vtanh.pop %v833
  %v856 = vtanh.pop %v838
  %v857 = vtanh.pop %v843
  %v858 = vtanh.pop %v848
  %v859 = vld [vmem:[#allocation3] sm:$0xff]
  %v860 = vld [vmem:[#allocation3 + $0x8] sm:$0x3]
  %v862 = vsel %vm34, %v859, 0
  %v865 = vsel %vm34, %v860, 0
  %867 = vmatprep.subr.mxu0 0.0
  %868 = vmatpush1.msra.mxu0 %v851
  %869 = vmatprep.subr.mxu0 0.0
  %870 = vmatpush1.msra.mxu0 %v852
  %871 = vmatprep.subr.mxu0 0.0
  %872 = vmatpush1.msra.mxu0 %v853
  %873 = vmatprep.subr.mxu0 0.0
  %874 = vmatpush1.msra.mxu0 %v854
  %875 = vmatprep.subr.mxu0 0.0
  %876 = vmatpush1.msra.mxu0 0.0
  %877 = vmatprep.subr.mxu0 0.0
  %878 = vmatpush1.msra.mxu0 0.0
  %879 = vmatprep.subr.mxu0 0.0
  %880 = vmatpush1.msra.mxu0 0.0
  %881 = vmatprep.subr.mxu0 0.0
  %882 = vmatpush1.msra.mxu0 0.0
  %883 = vmatprep.subr.mxu0 0.0
  %884 = vmatpush1.msra.mxu0 0.0
  %885 = vmatprep.subr.mxu0 0.0
  %886 = vmatpush1.msra.mxu0 0.0
  %887 = vmatprep.subr.mxu0 0.0
  %888 = vmatpush1.msra.mxu0 0.0
  %889 = vmatprep.subr.mxu0 0.0
  %890 = vmatpush1.msra.mxu0 0.0
  %891 = vmatprep.subr.mxu0 0.0
  %892 = vmatpush1.msra.mxu0 0.0
  %893 = vmatprep.subr.mxu0 0.0
  %894 = vmatpush1.msra.mxu0 0.0
  %895 = vmatprep.subr.mxu0 0.0
  %896 = vmatpush1.msra.mxu0 0.0
  %897 = vmatprep.subr.mxu0 0.0
  %898 = vmatpush1.msra.mxu0 0.0
  %899 = vmatprep.subr.mxu0 0.0
  %900 = vmatpush1.msra.mxu0 0.0
  %901 = vmatprep.subr.mxu0 0.0
  %902 = vmatpush1.msra.mxu0 0.0
  %903 = vmatprep.subr.mxu0 0.0
  %904 = vmatpush1.msra.mxu0 0.0
  %905 = vmatprep.subr.mxu0 0.0
  %906 = vmatpush1.msra.mxu0 0.0
  %907 = vmatprep.subr.mxu0 0.0
  %908 = vmatpush1.msra.mxu0 0.0
  %909 = vmatprep.subr.mxu0 0.0
  %910 = vmatpush1.msra.mxu0 0.0
  %911 = vmatprep.subr.mxu0 0.0
  %912 = vmatpush1.msra.mxu0 0.0
  %913 = vmatprep.subr.mxu0 0.0
  %914 = vmatpush1.msra.mxu0 0.0
  %915 = vmatprep.subr.mxu0 0.0
  %916 = vmatpush1.msra.mxu0 0.0
  %917 = vmatprep.subr.mxu0 0.0
  %918 = vmatpush1.msra.mxu0 0.0
  %919 = vmatprep.subr.mxu0 0.0
  %920 = vmatpush1.msra.mxu0 0.0
  %921 = vmatprep.subr.mxu0 0.0
  %922 = vmatpush1.msra.mxu0 0.0
  %923 = vmatprep.subr.mxu0 0.0
  %924 = vmatpush1.msra.mxu0 0.0
  %925 = vmatprep.subr.mxu0 0.0
  %926 = vmatpush1.msra.mxu0 0.0
  %927 = vmatprep.subr.mxu0 0.0
  %928 = vmatpush1.msra.mxu0 0.0
  %929 = vmatprep.subr.mxu0 0.0
  %930 = vmatpush1.msra.mxu0 0.0
  %931 = vmatprep.mubr.f32.mxu0 0.0
  %932 = vmatmul.mubr.f32.gmra.mrb[0].mxu0 %v862
  %v933 = vpop.f32.mrb[0].mxu0
  %v934 = vadd.f32 0.0, %v933
  %v935 = vpop.f32.mrb[0].mxu0
  %936 = vmatprep.mubr.f32.mxu0 0.0
  %937 = vmatmul.mubr.f32.gmra.mrb[0].mxu0 %v865
  %v938 = vpop.f32.mrb[0].mxu0
  %v939 = vadd.f32 0.0, %v938
  %v940 = vpop.f32.mrb[0].mxu0
  %941 = vdwg.mxu0
  %v942 = vtanh.pop %v934
  %v943 = vtanh.pop %v939
  %v944 = vmax.f32 %v942, 0.0
  %v945 = vmax.f32 %v943, 0.0
  %v946 = vld [vmem:[#allocation4] sm:$0xff]
  %v947 = vld [vmem:[#allocation4 + $0x8] sm:$0x3]
  %v949 = vsel %vm34, %v946, 0
  %v952 = vsel %vm34, %v947, 0
  %954 = vmatprep.subr.mxu0 0.0
  %955 = vmatpush1.msra.mxu0 %v855
  %956 = vmatprep.subr.mxu0 0.0
  %957 = vmatpush1.msra.mxu0 %v856
  %958 = vmatprep.subr.mxu0 0.0
  %959 = vmatpush1.msra.mxu0 %v857
  %960 = vmatprep.subr.mxu0 0.0
  %961 = vmatpush1.msra.mxu0 %v858
  %962 = vmatprep.subr.mxu0 0.0
  %963 = vmatpush1.msra.mxu0 0.0
  %964 = vmatprep.subr.mxu0 0.0
  %965 = vmatpush1.msra.mxu0 0.0
  %966 = vmatprep.subr.mxu0 0.0
  %967 = vmatpush1.msra.mxu0 0.0
  %968 = vmatprep.subr.mxu0 0.0
  %969 = vmatpush1.msra.mxu0 0.0
  %970 = vmatprep.subr.mxu0 0.0
  %971 = vmatpush1.msra.mxu0 0.0
  %972 = vmatprep.subr.mxu0 0.0
  %973 = vmatpush1.msra.mxu0 0.0
  %974 = vmatprep.subr.mxu0 0.0
  %975 = vmatpush1.msra.mxu0 0.0
  %976 = vmatprep.subr.mxu0 0.0
  %977 = vmatpush1.msra.mxu0 0.0
  %978 = vmatprep.subr.mxu0 0.0
  %979 = vmatpush1.msra.mxu0 0.0
  %980 = vmatprep.subr.mxu0 0.0
  %981 = vmatpush1.msra.mxu0 0.0
  %982 = vmatprep.subr.mxu0 0.0
  %983 = vmatpush1.msra.mxu0 0.0
  %984 = vmatprep.subr.mxu0 0.0
  %985 = vmatpush1.msra.mxu0 0.0
  %986 = vmatprep.subr.mxu0 0.0
  %987 = vmatpush1.msra.mxu0 0.0
  %988 = vmatprep.subr.mxu0 0.0
  %989 = vmatpush1.msra.mxu0 0.0
  %990 = vmatprep.subr.mxu0 0.0
  %991 = vmatpush1.msra.mxu0 0.0
  %992 = vmatprep.subr.mxu0 0.0
  %993 = vmatpush1.msra.mxu0 0.0
  %994 = vmatprep.subr.mxu0 0.0
  %995 = vmatpush1.msra.mxu0 0.0
  %996 = vmatprep.subr.mxu0 0.0
  %997 = vmatpush1.msra.mxu0 0.0
  %998 = vmatprep.subr.mxu0 0.0
  %999 = vmatpush1.msra.mxu0 0.0
  %1000 = vmatprep.subr.mxu0 0.0
  %1001 = vmatpush1.msra.mxu0 0.0
  %1002 = vmatprep.subr.mxu0 0.0
  %1003 = vmatpush1.msra.mxu0 0.0
  %1004 = vmatprep.subr.mxu0 0.0
  %1005 = vmatpush1.msra.mxu0 0.0
  %1006 = vmatprep.subr.mxu0 0.0
  %1007 = vmatpush1.msra.mxu0 0.0
  %1008 = vmatprep.subr.mxu0 0.0
  %1009 = vmatpush1.msra.mxu0 0.0
  %1010 = vmatprep.subr.mxu0 0.0
  %1011 = vmatpush1.msra.mxu0 0.0
  %1012 = vmatprep.subr.mxu0 0.0
  %1013 = vmatpush1.msra.mxu0 0.0
  %1014 = vmatprep.subr.mxu0 0.0
  %1015 = vmatpush1.msra.mxu0 0.0
  %1016 = vmatprep.subr.mxu0 0.0
  %1017 = vmatpush1.msra.mxu0 0.0
  %1018 = vmatprep.mubr.f32.mxu0 0.0
  %1019 = vmatmul.mubr.f32.gmra.mrb[0].mxu0 %v949
  %v1020 = vpop.f32.mrb[0].mxu0
  %v1021 = vadd.f32 0.0, %v1020
  %v1022 = vpop.f32.mrb[0].mxu0
  %1023 = vmatprep.mubr.f32.mxu0 0.0
  %1024 = vmatmul.mubr.f32.gmra.mrb[0].mxu0 %v952
  %v1025 = vpop.f32.mrb[0].mxu0
  %v1026 = vadd.f32 0.0, %v1025
  %v1027 = vpop.f32.mrb[0].mxu0
  %1028 = vdwg.mxu0
  %v1029 = vtanh.pop %v1021
  %v1030 = vtanh.pop %v1026
  %v1031 = vmax.f32 %v1029, 0.0
  %v1032 = vmax.f32 %v1030, 0.0
  %1033 = vst.msk [vmem:[#allocation6] sm:$0xff] %vm221, %v944
  %vm1034 = vcmask 517120
  %1035 = vst.msk [vmem:[#allocation6 + $0x8] sm:$0x3] %vm1034, %v945
  %s1036 = scalar_lea.vmem [#allocation6], 24
  %1037 = vst.msk [vmem:[%s1036] sm:$0xff] %vm221, %v1031
  %1038 = vst.msk [vmem:[%s1036 + $0x8] sm:$0x3] %vm1034, %v1032
  %v1039 = vld [vmem:[#allocation2 + $0xa] sm:$0xff]
  %v1040 = vld [vmem:[#allocation2 + $0x12] sm:$0x3]
  %v1041 = vld [vmem:[#allocation5] sm:$0xff]
  %v1042 = vld [vmem:[#allocation5 + $0x8] sm:$0xff]
  %v1043 = vld [vmem:[#allocation5 + $0x10] sm:$0xff]
  %v1044 = vld [vmem:[#allocation5 + $0x18] sm:$0xff]
  %v1045 = vld [vmem:[#allocation5 + $0x20] sm:$0xff]
  %v1046 = vld [vmem:[#allocation5 + $0x28] sm:$0xff]
  %v1047 = vld [vmem:[#allocation5 + $0x30] sm:$0xff]
  %v1048 = vld [vmem:[#allocation5 + $0x38] sm:$0xff]
  %1057 = vrot.lane.b32.xlu0 %v1041, 118
  %v1058 = vpop.permute.xlu0 %1057
  %1059 = vrot.lane.b32.xlu0 %v1042, 118
  %v1060 = vpop.permute.xlu0 %1059
  %1061 = vrot.lane.b32.xlu0 %v1043, 118
  %v1062 = vpop.permute.xlu0 %1061
  %1063 = vrot.lane.b32.xlu0 %v1044, 118
  %v1064 = vpop.permute.xlu0 %1063
  %1065 = vrot.lane.b32.xlu0 %v1045, 118
  %v1066 = vpop.permute.xlu0 %1065
  %1067 = vrot.lane.b32.xlu0 %v1046, 118
  %v1068 = vpop.permute.xlu0 %1067
  %1069 = vrot.lane.b32.xlu0 %v1047, 118
  %v1070 = vpop.permute.xlu0 %1069
  %1071 = vrot.lane.b32.xlu0 %v1048, 118
  %v1072 = vpop.permute.xlu0 %1071
  %v1073 = vsel %vm717, %v1058, 0
  %v1075 = vsel %vm717, %v1060, 0
  %v1077 = vsel %vm717, %v1062, 0
  %v1079 = vsel %vm717, %v1064, 0
  %v1081 = vsel %vm717, %v1066, 0
  %v1083 = vsel %vm717, %v1068, 0
  %v1085 = vsel %vm717, %v1070, 0
  %v1087 = vsel %vm717, %v1072, 0
  %v1090 = vsel %vm742, %v1040, 0
  %1092 = vmatprep.subr.mxu0 0.0
  %1093 = vmatpush1.msra.mxu0 %v1039
  %1094 = vmatprep.subr.mxu0 0.0
  %1095 = vmatpush1.msra.mxu0 %v1090
  %1096 = vmatprep.subr.mxu0 0.0
  %1097 = vmatpush1.msra.mxu0 0.0
  %1098 = vmatprep.subr.mxu0 0.0
  %1099 = vmatpush1.msra.mxu0 0.0
  %1100 = vmatprep.subr.mxu0 0.0
  %1101 = vmatpush1.msra.mxu0 0.0
  %1102 = vmatprep.subr.mxu0 0.0
  %1103 = vmatpush1.msra.mxu0 0.0
  %1104 = vmatprep.subr.mxu0 0.0
  %1105 = vmatpush1.msra.mxu0 0.0
  %1106 = vmatprep.subr.mxu0 0.0
  %1107 = vmatpush1.msra.mxu0 0.0
  %1108 = vmatprep.subr.mxu0 0.0
  %1109 = vmatpush1.msra.mxu0 0.0
  %1110 = vmatprep.subr.mxu0 0.0
  %1111 = vmatpush1.msra.mxu0 0.0
  %1112 = vmatprep.subr.mxu0 0.0
  %1113 = vmatpush1.msra.mxu0 0.0
  %1114 = vmatprep.subr.mxu0 0.0
  %1115 = vmatpush1.msra.mxu0 0.0
  %1116 = vmatprep.subr.mxu0 0.0
  %1117 = vmatpush1.msra.mxu0 0.0
  %1118 = vmatprep.subr.mxu0 0.0
  %1119 = vmatpush1.msra.mxu0 0.0
  %1120 = vmatprep.subr.mxu0 0.0
  %1121 = vmatpush1.msra.mxu0 0.0
  %1122 = vmatprep.subr.mxu0 0.0
  %1123 = vmatpush1.msra.mxu0 0.0
  %1124 = vmatprep.subr.mxu0 0.0
  %1125 = vmatpush1.msra.mxu0 0.0
  %1126 = vmatprep.subr.mxu0 0.0
  %1127 = vmatpush1.msra.mxu0 0.0
  %1128 = vmatprep.subr.mxu0 0.0
  %1129 = vmatpush1.msra.mxu0 0.0
  %1130 = vmatprep.subr.mxu0 0.0
  %1131 = vmatpush1.msra.mxu0 0.0
  %1132 = vmatprep.subr.mxu0 0.0
  %1133 = vmatpush1.msra.mxu0 0.0
  %1134 = vmatprep.subr.mxu0 0.0
  %1135 = vmatpush1.msra.mxu0 0.0
  %1136 = vmatprep.subr.mxu0 0.0
  %1137 = vmatpush1.msra.mxu0 0.0
  %1138 = vmatprep.subr.mxu0 0.0
  %1139 = vmatpush1.msra.mxu0 0.0
  %1140 = vmatprep.subr.mxu0 0.0
  %1141 = vmatpush1.msra.mxu0 0.0
  %1142 = vmatprep.subr.mxu0 0.0
  %1143 = vmatpush1.msra.mxu0 0.0
  %1144 = vmatprep.subr.mxu0 0.0
  %1145 = vmatpush1.msra.mxu0 0.0
  %1146 = vmatprep.subr.mxu0 0.0
  %1147 = vmatpush1.msra.mxu0 0.0
  %1148 = vmatprep.subr.mxu0 0.0
  %1149 = vmatpush1.msra.mxu0 0.0
  %1150 = vmatprep.subr.mxu0 0.0
  %1151 = vmatpush1.msra.mxu0 0.0
  %1152 = vmatprep.subr.mxu0 0.0
  %1153 = vmatpush1.msra.mxu0 0.0
  %1154 = vmatprep.subr.mxu0 0.0
  %1155 = vmatpush1.msra.mxu0 0.0
  %1156 = vmatprep.mubr.f32.mxu0 0.0
  %1157 = vmatmul.mubr.f32.gmra.mrb[0].mxu0 %v1073
  %v1158 = vpop.f32.mrb[0].mxu0
  %v1159 = vadd.f32 0.0, %v1158
  %v1160 = vpop.f32.mrb[0].mxu0
  %1161 = vmatprep.mubr.f32.mxu0 0.0
  %1162 = vmatmul.mubr.f32.gmra.mrb[0].mxu0 %v1075
  %v1163 = vpop.f32.mrb[0].mxu0
  %v1164 = vadd.f32 0.0, %v1163
  %v1165 = vpop.f32.mrb[0].mxu0
  %1166 = vmatprep.mubr.f32.mxu0 0.0
  %1167 = vmatmul.mubr.f32.gmra.mrb[0].mxu0 %v1077
  %v1168 = vpop.f32.mrb[0].mxu0
  %v1169 = vadd.f32 0.0, %v1168
  %v1170 = vpop.f32.mrb[0].mxu0
  %1171 = vmatprep.mubr.f32.mxu0 0.0
  %1172 = vmatmul.mubr.f32.gmra.mrb[0].mxu0 %v1079
  %v1173 = vpop.f32.mrb[0].mxu0
  %v1174 = vadd.f32 0.0, %v1173
  %v1175 = vpop.f32.mrb[0].mxu0
  %1176 = vmatprep.mubr.f32.mxu0 0.0
  %1177 = vmatmul.mubr.f32.gmra.mrb[0].mxu0 %v1081
  %v1178 = vpop.f32.mrb[0].mxu0
  %v1179 = vadd.f32 0.0, %v1178
  %v1180 = vpop.f32.mrb[0].mxu0
  %1181 = vmatprep.mubr.f32.mxu0 0.0
  %1182 = vmatmul.mubr.f32.gmra.mrb[0].mxu0 %v1083
  %v1183 = vpop.f32.mrb[0].mxu0
  %v1184 = vadd.f32 0.0, %v1183
  %v1185 = vpop.f32.mrb[0].mxu0
  %1186 = vmatprep.mubr.f32.mxu0 0.0
  %1187 = vmatmul.mubr.f32.gmra.mrb[0].mxu0 %v1085
  %v1188 = vpop.f32.mrb[0].mxu0
  %v1189 = vadd.f32 0.0, %v1188
  %v1190 = vpop.f32.mrb[0].mxu0
  %1191 = vmatprep.mubr.f32.mxu0 0.0
  %1192 = vmatmul.mubr.f32.gmra.mrb[0].mxu0 %v1087
  %v1193 = vpop.f32.mrb[0].mxu0
  %v1194 = vadd.f32 0.0, %v1193
  %v1195 = vpop.f32.mrb[0].mxu0
  %1196 = vdwg.mxu0
  %v1197 = vtanh.pop %v1159
  %v1198 = vtanh.pop %v1164
  %v1199 = vtanh.pop %v1169
  %v1200 = vtanh.pop %v1174
  %v1201 = vtanh.pop %v1179
  %v1202 = vtanh.pop %v1184
  %v1203 = vtanh.pop %v1189
  %v1204 = vtanh.pop %v1194
  %v1205 = vld [vmem:[#allocation3 + $0xa] sm:$0xff]
  %v1206 = vld [vmem:[#allocation3 + $0x12] sm:$0x3]
  %v1208 = vsel %vm34, %v1205, 0
  %v1211 = vsel %vm34, %v1206, 0
  %1213 = vmatprep.subr.mxu0 0.0
  %1214 = vmatpush1.msra.mxu0 %v1197
  %1215 = vmatprep.subr.mxu0 0.0
  %1216 = vmatpush1.msra.mxu0 %v1198
  %1217 = vmatprep.subr.mxu0 0.0
  %1218 = vmatpush1.msra.mxu0 %v1199
  %1219 = vmatprep.subr.mxu0 0.0
  %1220 = vmatpush1.msra.mxu0 %v1200
  %1221 = vmatprep.subr.mxu0 0.0
  %1222 = vmatpush1.msra.mxu0 0.0
  %1223 = vmatprep.subr.mxu0 0.0
  %1224 = vmatpush1.msra.mxu0 0.0
  %1225 = vmatprep.subr.mxu0 0.0
  %1226 = vmatpush1.msra.mxu0 0.0
  %1227 = vmatprep.subr.mxu0 0.0
  %1228 = vmatpush1.msra.mxu0 0.0
  %1229 = vmatprep.subr.mxu0 0.0
  %1230 = vmatpush1.msra.mxu0 0.0
  %1231 = vmatprep.subr.mxu0 0.0
  %1232 = vmatpush1.msra.mxu0 0.0
  %1233 = vmatprep.subr.mxu0 0.0
  %1234 = vmatpush1.msra.mxu0 0.0
  %1235 = vmatprep.subr.mxu0 0.0
  %1236 = vmatpush1.msra.mxu0 0.0
  %1237 = vmatprep.subr.mxu0 0.0
  %1238 = vmatpush1.msra.mxu0 0.0
  %1239 = vmatprep.subr.mxu0 0.0
  %1240 = vmatpush1.msra.mxu0 0.0
  %1241 = vmatprep.subr.mxu0 0.0
  %1242 = vmatpush1.msra.mxu0 0.0
  %1243 = vmatprep.subr.mxu0 0.0
  %1244 = vmatpush1.msra.mxu0 0.0
  %1245 = vmatprep.subr.mxu0 0.0
  %1246 = vmatpush1.msra.mxu0 0.0
  %1247 = vmatprep.subr.mxu0 0.0
  %1248 = vmatpush1.msra.mxu0 0.0
  %1249 = vmatprep.subr.mxu0 0.0
  %1250 = vmatpush1.msra.mxu0 0.0
  %1251 = vmatprep.subr.mxu0 0.0
  %1252 = vmatpush1.msra.mxu0 0.0
  %1253 = vmatprep.subr.mxu0 0.0
  %1254 = vmatpush1.msra.mxu0 0.0
  %1255 = vmatprep.subr.mxu0 0.0
  %1256 = vmatpush1.msra.mxu0 0.0
  %1257 = vmatprep.subr.mxu0 0.0
  %1258 = vmatpush1.msra.mxu0 0.0
  %1259 = vmatprep.subr.mxu0 0.0
  %1260 = vmatpush1.msra.mxu0 0.0
  %1261 = vmatprep.subr.mxu0 0.0
  %1262 = vmatpush1.msra.mxu0 0.0
  %1263 = vmatprep.subr.mxu0 0.0
  %1264 = vmatpush1.msra.mxu0 0.0
  %1265 = vmatprep.subr.mxu0 0.0
  %1266 = vmatpush1.msra.mxu0 0.0
  %1267 = vmatprep.subr.mxu0 0.0
  %1268 = vmatpush1.msra.mxu0 0.0
  %1269 = vmatprep.subr.mxu0 0.0
  %1270 = vmatpush1.msra.mxu0 0.0
  %1271 = vmatprep.subr.mxu0 0.0
  %1272 = vmatpush1.msra.mxu0 0.0
  %1273 = vmatprep.subr.mxu0 0.0
  %1274 = vmatpush1.msra.mxu0 0.0
  %1275 = vmatprep.subr.mxu0 0.0
  %1276 = vmatpush1.msra.mxu0 0.0
  %1277 = vmatprep.mubr.f32.mxu0 0.0
  %1278 = vmatmul.mubr.f32.gmra.mrb[0].mxu0 %v1208
  %v1279 = vpop.f32.mrb[0].mxu0
  %v1280 = vadd.f32 0.0, %v1279
  %v1281 = vpop.f32.mrb[0].mxu0
  %1282 = vmatprep.mubr.f32.mxu0 0.0
  %1283 = vmatmul.mubr.f32.gmra.mrb[0].mxu0 %v1211
  %v1284 = vpop.f32.mrb[0].mxu0
  %v1285 = vadd.f32 0.0, %v1284
  %v1286 = vpop.f32.mrb[0].mxu0
  %1287 = vdwg.mxu0
  %v1288 = vtanh.pop %v1280
  %v1289 = vtanh.pop %v1285
  %v1290 = vmax.f32 %v1288, 0.0
  %v1291 = vmax.f32 %v1289, 0.0
  %v1292 = vld [vmem:[#allocation4 + $0xa] sm:$0xff]
  %v1293 = vld [vmem:[#allocation4 + $0x12] sm:$0x3]
  %v1295 = vsel %vm34, %v1292, 0
  %v1298 = vsel %vm34, %v1293, 0
  %1300 = vmatprep.subr.mxu0 0.0
  %1301 = vmatpush1.msra.mxu0 %v1201
  %1302 = vmatprep.subr.mxu0 0.0
  %1303 = vmatpush1.msra.mxu0 %v1202
  %1304 = vmatprep.subr.mxu0 0.0
  %1305 = vmatpush1.msra.mxu0 %v1203
  %1306 = vmatprep.subr.mxu0 0.0
  %1307 = vmatpush1.msra.mxu0 %v1204
  %1308 = vmatprep.subr.mxu0 0.0
  %1309 = vmatpush1.msra.mxu0 0.0
  %1310 = vmatprep.subr.mxu0 0.0
  %1311 = vmatpush1.msra.mxu0 0.0
  %1312 = vmatprep.subr.mxu0 0.0
  %1313 = vmatpush1.msra.mxu0 0.0
  %1314 = vmatprep.subr.mxu0 0.0
  %1315 = vmatpush1.msra.mxu0 0.0
  %1316 = vmatprep.subr.mxu0 0.0
  %1317 = vmatpush1.msra.mxu0 0.0
  %1318 = vmatprep.subr.mxu0 0.0
  %1319 = vmatpush1.msra.mxu0 0.0
  %1320 = vmatprep.subr.mxu0 0.0
  %1321 = vmatpush1.msra.mxu0 0.0
  %1322 = vmatprep.subr.mxu0 0.0
  %1323 = vmatpush1.msra.mxu0 0.0
  %1324 = vmatprep.subr.mxu0 0.0
  %1325 = vmatpush1.msra.mxu0 0.0
  %1326 = vmatprep.subr.mxu0 0.0
  %1327 = vmatpush1.msra.mxu0 0.0
  %1328 = vmatprep.subr.mxu0 0.0
  %1329 = vmatpush1.msra.mxu0 0.0
  %1330 = vmatprep.subr.mxu0 0.0
  %1331 = vmatpush1.msra.mxu0 0.0
  %1332 = vmatprep.subr.mxu0 0.0
  %1333 = vmatpush1.msra.mxu0 0.0
  %1334 = vmatprep.subr.mxu0 0.0
  %1335 = vmatpush1.msra.mxu0 0.0
  %1336 = vmatprep.subr.mxu0 0.0
  %1337 = vmatpush1.msra.mxu0 0.0
  %1338 = vmatprep.subr.mxu0 0.0
  %1339 = vmatpush1.msra.mxu0 0.0
  %1340 = vmatprep.subr.mxu0 0.0
  %1341 = vmatpush1.msra.mxu0 0.0
  %1342 = vmatprep.subr.mxu0 0.0
  %1343 = vmatpush1.msra.mxu0 0.0
  %1344 = vmatprep.subr.mxu0 0.0
  %1345 = vmatpush1.msra.mxu0 0.0
  %1346 = vmatprep.subr.mxu0 0.0
  %1347 = vmatpush1.msra.mxu0 0.0
  %1348 = vmatprep.subr.mxu0 0.0
  %1349 = vmatpush1.msra.mxu0 0.0
  %1350 = vmatprep.subr.mxu0 0.0
  %1351 = vmatpush1.msra.mxu0 0.0
  %1352 = vmatprep.subr.mxu0 0.0
  %1353 = vmatpush1.msra.mxu0 0.0
  %1354 = vmatprep.subr.mxu0 0.0
  %1355 = vmatpush1.msra.mxu0 0.0
  %1356 = vmatprep.subr.mxu0 0.0
  %1357 = vmatpush1.msra.mxu0 0.0
  %1358 = vmatprep.subr.mxu0 0.0
  %1359 = vmatpush1.msra.mxu0 0.0
  %1360 = vmatprep.subr.mxu0 0.0
  %1361 = vmatpush1.msra.mxu0 0.0
  %1362 = vmatprep.subr.mxu0 0.0
  %1363 = vmatpush1.msra.mxu0 0.0
  %1364 = vmatprep.mubr.f32.mxu0 0.0
  %1365 = vmatmul.mubr.f32.gmra.mrb[0].mxu0 %v1295
  %v1366 = vpop.f32.mrb[0].mxu0
  %v1367 = vadd.f32 0.0, %v1366
  %v1368 = vpop.f32.mrb[0].mxu0
  %1369 = vmatprep.mubr.f32.mxu0 0.0
  %1370 = vmatmul.mubr.f32.gmra.mrb[0].mxu0 %v1298
  %v1371 = vpop.f32.mrb[0].mxu0
  %v1372 = vadd.f32 0.0, %v1371
  %v1373 = vpop.f32.mrb[0].mxu0
  %1374 = vdwg.mxu0
  %v1375 = vtanh.pop %v1367
  %v1376 = vtanh.pop %v1372
  %v1377 = vmax.f32 %v1375, 0.0
  %v1378 = vmax.f32 %v1376, 0.0
  %1379 = vst.msk [vmem:[#allocation6 + $0xa] sm:$0xff] %vm221, %v1290
  %1380 = vst.msk [vmem:[#allocation6 + $0x12] sm:$0x3] %vm1034, %v1291
  %1381 = vst.msk [vmem:[%s1036 + $0xa] sm:$0xff] %vm221, %v1377
  %1382 = vst.msk [vmem:[%s1036 + $0x12] sm:$0x3] %vm1034, %v1378
  %v1383 = vld [vmem:[%s2 + $0x98] sm:$0xff]
  %v1384 = vld [vmem:[%s2 + $0xa0] sm:$0xff]
  %v1385 = vld [vmem:[%s2 + $0xa8] sm:$0xff]
  %v1386 = vld [vmem:[%s2 + $0xb0] sm:$0xff]
  %v1387 = vld [vmem:[%s2 + $0xb8] sm:$0xff]
  %v1388 = vld [vmem:[%s2 + $0xc0] sm:$0xff]
  %v1389 = vld [vmem:[%s2 + $0xc8] sm:$0xff]
  %v1390 = vld [vmem:[%s2 + $0xd0] sm:$0xff]
  %v1391 = vld [vmem:[%s2 + $0xd8] sm:$0x1]
  %v1392 = vld [vmem:[#allocation6] sm:$0xff]
  %v1393 = vld [vmem:[#allocation6 + $0x8] sm:$0xff]
  %v1394 = vld [vmem:[#allocation6 + $0x10] sm:$0xf]
  %v1395 = vlaneseq
  %v1396 = vshrl.u32 %v1395, 7
  %v1397 = vsub.s32 0, %v1396
  %v1398 = vrot.slane %v1391, %v1397
  %v1400 = vsel %vm221, %v1392, 0
  %v1403 = vsel %vm221, %v1393, 0
  %v1406 = vsel %vm221, %v1394, 0
  %1408 = vmatprep.subr.mxu0 0.0
  %1409 = vmatpush1.msra.mxu0 %v1383
  %1410 = vmatprep.subr.mxu0 0.0
  %1411 = vmatpush1.msra.mxu0 %v1384
  %1412 = vmatprep.subr.mxu0 0.0
  %1413 = vmatpush1.msra.mxu0 %v1385
  %1414 = vmatprep.subr.mxu0 0.0
  %1415 = vmatpush1.msra.mxu0 %v1386
  %1416 = vmatprep.subr.mxu0 0.0
  %1417 = vmatpush1.msra.mxu0 %v1387
  %1418 = vmatprep.subr.mxu0 0.0
  %1419 = vmatpush1.msra.mxu0 %v1388
  %1420 = vmatprep.subr.mxu0 0.0
  %1421 = vmatpush1.msra.mxu0 %v1389
  %1422 = vmatprep.subr.mxu0 0.0
  %1423 = vmatpush1.msra.mxu0 %v1390
  %1424 = vmatprep.subr.mxu0 0.0
  %1425 = vmatpush1.msra.mxu0 0.0
  %1426 = vmatprep.subr.mxu0 0.0
  %1427 = vmatpush1.msra.mxu0 0.0
  %1428 = vmatprep.subr.mxu0 0.0
  %1429 = vmatpush1.msra.mxu0 0.0
  %1430 = vmatprep.subr.mxu0 0.0
  %1431 = vmatpush1.msra.mxu0 0.0
  %1432 = vmatprep.subr.mxu0 0.0
  %1433 = vmatpush1.msra.mxu0 0.0
  %1434 = vmatprep.subr.mxu0 0.0
  %1435 = vmatpush1.msra.mxu0 0.0
  %1436 = vmatprep.subr.mxu0 0.0
  %1437 = vmatpush1.msra.mxu0 0.0
  %1438 = vmatprep.subr.mxu0 0.0
  %1439 = vmatpush1.msra.mxu0 0.0
  %1440 = vmatprep.subr.mxu0 0.0
  %1441 = vmatpush1.msra.mxu0 0.0
  %1442 = vmatprep.subr.mxu0 0.0
  %1443 = vmatpush1.msra.mxu0 0.0
  %1444 = vmatprep.subr.mxu0 0.0
  %1445 = vmatpush1.msra.mxu0 0.0
  %1446 = vmatprep.subr.mxu0 0.0
  %1447 = vmatpush1.msra.mxu0 0.0
  %1448 = vmatprep.subr.mxu0 0.0
  %1449 = vmatpush1.msra.mxu0 0.0
  %1450 = vmatprep.subr.mxu0 0.0
  %1451 = vmatpush1.msra.mxu0 0.0
  %1452 = vmatprep.subr.mxu0 0.0
  %1453 = vmatpush1.msra.mxu0 0.0
  %1454 = vmatprep.subr.mxu0 0.0
  %1455 = vmatpush1.msra.mxu0 0.0
  %1456 = vmatprep.subr.mxu0 0.0
  %1457 = vmatpush1.msra.mxu0 0.0
  %1458 = vmatprep.subr.mxu0 0.0
  %1459 = vmatpush1.msra.mxu0 0.0
  %1460 = vmatprep.subr.mxu0 0.0
  %1461 = vmatpush1.msra.mxu0 0.0
  %1462 = vmatprep.subr.mxu0 0.0
  %1463 = vmatpush1.msra.mxu0 0.0
  %1464 = vmatprep.subr.mxu0 0.0
  %1465 = vmatpush1.msra.mxu0 0.0
  %1466 = vmatprep.subr.mxu0 0.0
  %1467 = vmatpush1.msra.mxu0 0.0
  %1468 = vmatprep.subr.mxu0 0.0
  %1469 = vmatpush1.msra.mxu0 0.0
  %1470 = vmatprep.subr.mxu0 0.0
  %1471 = vmatpush1.msra.mxu0 0.0
  %1472 = vmatprep.mubr.f32.mxu0 0.0
  %1473 = vmatmul.mubr.f32.gmra.mrb[0].mxu0 %v1400
  %v1474 = vpop.f32.mrb[0].mxu0
  %v1475 = vadd.f32 %v1398, %v1474
  %v1476 = vpop.f32.mrb[0].mxu0
  %1477 = vmatprep.mubr.f32.mxu0 0.0
  %1478 = vmatmul.mubr.f32.gmra.mrb[0].mxu0 %v1403
  %v1479 = vpop.f32.mrb[0].mxu0
  %v1480 = vadd.f32 %v1398, %v1479
  %v1481 = vpop.f32.mrb[0].mxu0
  %1482 = vmatprep.mubr.f32.mxu0 0.0
  %1483 = vmatmul.mubr.f32.gmra.mrb[0].mxu0 %v1406
  %v1484 = vpop.f32.mrb[0].mxu0
  %v1485 = vadd.f32 %v1398, %v1484
  %v1486 = vpop.f32.mrb[0].mxu0
  %1487 = vdwg.mxu0
  %v1488 = vmax.f32 %v1475, 0.0
  %v1489 = vmax.f32 %v1480, 0.0
  %v1490 = vmax.f32 %v1485, 0.0
  %v1491 = vld [vmem:[%s1036] sm:$0xff]
  %v1492 = vld [vmem:[%s1036 + $0x8] sm:$0xff]
  %v1493 = vld [vmem:[%s1036 + $0x10] sm:$0xf]
  %v1495 = vsel %vm221, %v1491, 0
  %v1498 = vsel %vm221, %v1492, 0
  %v1501 = vsel %vm221, %v1493, 0
  %1503 = vmatprep.subr.mxu0 0.0
  %1504 = vmatpush1.msra.mxu0 %v1383
  %1505 = vmatprep.subr.mxu0 0.0
  %1506 = vmatpush1.msra.mxu0 %v1384
  %1507 = vmatprep.subr.mxu0 0.0
  %1508 = vmatpush1.msra.mxu0 %v1385
  %1509 = vmatprep.subr.mxu0 0.0
  %1510 = vmatpush1.msra.mxu0 %v1386
  %1511 = vmatprep.subr.mxu0 0.0
  %1512 = vmatpush1.msra.mxu0 %v1387
  %1513 = vmatprep.subr.mxu0 0.0
  %1514 = vmatpush1.msra.mxu0 %v1388
  %1515 = vmatprep.subr.mxu0 0.0
  %1516 = vmatpush1.msra.mxu0 %v1389
  %1517 = vmatprep.subr.mxu0 0.0
  %1518 = vmatpush1.msra.mxu0 %v1390
  %1519 = vmatprep.subr.mxu0 0.0
  %1520 = vmatpush1.msra.mxu0 0.0
  %1521 = vmatprep.subr.mxu0 0.0
  %1522 = vmatpush1.msra.mxu0 0.0
  %1523 = vmatprep.subr.mxu0 0.0
  %1524 = vmatpush1.msra.mxu0 0.0
  %1525 = vmatprep.subr.mxu0 0.0
  %1526 = vmatpush1.msra.mxu0 0.0
  %1527 = vmatprep.subr.mxu0 0.0
  %1528 = vmatpush1.msra.mxu0 0.0
  %1529 = vmatprep.subr.mxu0 0.0
  %1530 = vmatpush1.msra.mxu0 0.0
  %1531 = vmatprep.subr.mxu0 0.0
  %1532 = vmatpush1.msra.mxu0 0.0
  %1533 = vmatprep.subr.mxu0 0.0
  %1534 = vmatpush1.msra.mxu0 0.0
  %1535 = vmatprep.subr.mxu0 0.0
  %1536 = vmatpush1.msra.mxu0 0.0
  %1537 = vmatprep.subr.mxu0 0.0
  %1538 = vmatpush1.msra.mxu0 0.0
  %1539 = vmatprep.subr.mxu0 0.0
  %1540 = vmatpush1.msra.mxu0 0.0
  %1541 = vmatprep.subr.mxu0 0.0
  %1542 = vmatpush1.msra.mxu0 0.0
  %1543 = vmatprep.subr.mxu0 0.0
  %1544 = vmatpush1.msra.mxu0 0.0
  %1545 = vmatprep.subr.mxu0 0.0
  %1546 = vmatpush1.msra.mxu0 0.0
  %1547 = vmatprep.subr.mxu0 0.0
  %1548 = vmatpush1.msra.mxu0 0.0
  %1549 = vmatprep.subr.mxu0 0.0
  %1550 = vmatpush1.msra.mxu0 0.0
  %1551 = vmatprep.subr.mxu0 0.0
  %1552 = vmatpush1.msra.mxu0 0.0
  %1553 = vmatprep.subr.mxu0 0.0
  %1554 = vmatpush1.msra.mxu0 0.0
  %1555 = vmatprep.subr.mxu0 0.0
  %1556 = vmatpush1.msra.mxu0 0.0
  %1557 = vmatprep.subr.mxu0 0.0
  %1558 = vmatpush1.msra.mxu0 0.0
  %1559 = vmatprep.subr.mxu0 0.0
  %1560 = vmatpush1.msra.mxu0 0.0
  %1561 = vmatprep.subr.mxu0 0.0
  %1562 = vmatpush1.msra.mxu0 0.0
  %1563 = vmatprep.subr.mxu0 0.0
  %1564 = vmatpush1.msra.mxu0 0.0
  %1565 = vmatprep.subr.mxu0 0.0
  %1566 = vmatpush1.msra.mxu0 0.0
  %1567 = vmatprep.mubr.f32.mxu0 0.0
  %1568 = vmatmul.mubr.f32.gmra.mrb[0].mxu0 %v1495
  %v1569 = vpop.f32.mrb[0].mxu0
  %v1570 = vadd.f32 %v1398, %v1569
  %v1571 = vpop.f32.mrb[0].mxu0
  %1572 = vmatprep.mubr.f32.mxu0 0.0
  %1573 = vmatmul.mubr.f32.gmra.mrb[0].mxu0 %v1498
  %v1574 = vpop.f32.mrb[0].mxu0
  %v1575 = vadd.f32 %v1398, %v1574
  %v1576 = vpop.f32.mrb[0].mxu0
  %1577 = vmatprep.mubr.f32.mxu0 0.0
  %1578 = vmatmul.mubr.f32.gmra.mrb[0].mxu0 %v1501
  %v1579 = vpop.f32.mrb[0].mxu0
  %v1580 = vadd.f32 %v1398, %v1579
  %v1581 = vpop.f32.mrb[0].mxu0
  %1582 = vdwg.mxu0
  %v1583 = vmax.f32 %v1570, 0.0
  %v1584 = vmax.f32 %v1575, 0.0
  %v1585 = vmax.f32 %v1580, 0.0
  %v1586 = vld [vmem:[%s0] sm:$0xff]
  %v1587 = vld [vmem:[%s0 + $0x8] sm:$0xff]
  %v1588 = vld [vmem:[%s0 + $0x10] sm:$0xf]
  %v1589 = vld [vmem:[%s1] sm:$0xff]
  %v1590 = vld [vmem:[%s1 + $0x8] sm:$0xff]
  %v1591 = vld [vmem:[%s1 + $0x10] sm:$0xf]
  %v1592 = vadd.f32 %v1586, %v1589
  %v1593 = vadd.f32 %v1587, %v1590
  %v1594 = vadd.f32 %v1588, %v1591
  %v1595 = vadd.f32 %v1592, %v1488
  %v1596 = vadd.f32 %v1593, %v1489
  %v1597 = vadd.f32 %v1594, %v1490
  %v1598 = vadd.f32 %v1595, %v1583
  %v1599 = vadd.f32 %v1596, %v1584
  %v1600 = vadd.f32 %v1597, %v1585
  %1601 = vst.msk [vmem:[%s5] sm:$0xff] %vm34, %v1598
  %1602 = vst.msk [vmem:[%s5 + $0x8] sm:$0xff] %vm34, %v1599
  %1603 = vst.msk [vmem:[%s5 + $0x10] sm:$0xf] %vm317, %v1600
  // Predicated region
  $region22: #{_lambda_.1} parent=0 // pred_check
    _
  $region23: #{_lambda_.1} parent=0 // pred_check_branch
    %1605 = sbr.rel (0) target = $region25
  $region24: #{_lambda_.1} parent=0 // pred_region
    _
  $region25: #{_lambda_.1} parent=0 // pred_fallthru
    _
  // Predicated region
  $region26: #{_lambda_.1} parent=0 // pred_check
    _
  $region27: #{_lambda_.1} parent=0 // pred_check_branch
    %1607 = sbr.rel (0) target = $region29
  $region28: #{_lambda_.1} parent=0 // pred_region
    _
  $region29: #{_lambda_.1} parent=0 // pred_fallthru
    _

</llo_original>
